<compile_context>
chip_gen: v7x
topology: tpu7x:2x2x1
jax: 0.10.0
libtpu: 0.0.40
codegen_flags: <defaults>
</compile_context>

<pallas_src>
import functools

import jax
import jax.numpy as jnp
from jax import lax
from jax.experimental import pallas as pl
from jax.experimental.pallas import tpu as pltpu


# ---------------------------------------------------------------------------
# Generation-aware knobs.
# ---------------------------------------------------------------------------
def _device_kind():
    try:
        return jax.devices()[0].device_kind.lower()
    except Exception:
        return ""


def _is_v7x(kind):
    return ("v7" in kind) or ("7x" in kind)


def _exp_in_bf16(kind):
    # v6e/v7x have a bf16 EUP (~2x exp throughput); v5e does not -> f32 exp.
    return ("v6" in kind) or _is_v7x(kind)


def _vmem_limit(kind, working_bytes):
    phys = (64 if _is_v7x(kind) else 128) << 20
    cap = int(phys * 0.85)
    want = int(working_bytes) + (16 << 20)         # headroom for compiler temps
    return max(32 << 20, min(want, cap))


def _pick_query_tile(hw, cap=512):
    """Largest lane-aligned (multiple of 128) query tile <= cap dividing HW."""
    if hw <= cap:
        return hw
    for t in range(cap - (cap % 128), 127, -128):
        if hw % t == 0:
            return t
    # TODO(synk): HW > cap with no 128-multiple divisor falls back to a single
    # full-HW query tile (the whole (HW, HW) score slab lives in VMEM).
    return hw


# ---------------------------------------------------------------------------
# Stage 1: projections + cross attention for one (batch, query-tile) step.
# ---------------------------------------------------------------------------
def _attn_kernel(x0_ref, x1_ref, x1q_ref, wg_ref, bg_ref, wt_ref, bt_ref,
                 wp_ref, bp_ref, y_ref, *, exp_bf16):
    """Emits y[q_tile] as (TQ, C8) - bit-identical to torch's contiguous y."""
    C8 = wt_ref.shape[0]
    x0 = x0_ref[0].astype(jnp.bfloat16)      # (C, HW)  source of g (values)
    x1 = x1_ref[0].astype(jnp.bfloat16)      # (C, HW)  source of theta (keys)
    x1q = x1q_ref[0].astype(jnp.bfloat16)    # (C, TQ)  source of phi (queries)

    # 1x1 convs as channel matmuls (MXU), bf16 operands / f32 accumulation.
    # wg is augmented with an all-zero row (bias 1.0): the same matmul also
    # produces the all-ones row, folding the softmax row-sum matvec into the
    # y matmul below.
    g_aug = (jnp.dot(wg_ref[...], x0, preferred_element_type=jnp.float32)
             + bg_ref[...]).astype(jnp.bfloat16)                       # (C8+1, HW)
    th = (jnp.dot(wt_ref[...], x1, preferred_element_type=jnp.float32)
          + bt_ref[...]).astype(jnp.bfloat16)                          # (C8, HW)
    ph = (jnp.dot(wp_ref[...], x1q, preferred_element_type=jnp.float32)
          + bp_ref[...]).astype(jnp.bfloat16)                          # (C8, TQ)

    # f[i, j] = sum_k phi[k, i] * theta[k, j]: transposed-LHS MXU matmul
    # (pl.dot trans_a form) - contraction on dim 0 of both, no XLU relayout.
    f = lax.dot_general(ph, th, (((0,), (0,)), ((), ())),
                        preferred_element_type=jnp.float32)            # (TQ, HW)

    # Softmax over keys with deferred normalisation.
    m = jnp.max(f, axis=-1, keepdims=True)
    if exp_bf16:
        p = jnp.exp((f - m).astype(jnp.bfloat16))    # bf16 EUP (v6e / v7x)
    else:
        p = jnp.exp(f - m).astype(jnp.bfloat16)      # f32 EUP (v5e)

    # y_aug[i, c] = sum_j p[i, j] * g_aug[c, j]; column C8 holds row-sums of p.
    y_aug = lax.dot_general(p, g_aug, (((1,), (1,)), ((), ())),
                            preferred_element_type=jnp.float32)        # (TQ, C8+1)
    inv_l = pl.reciprocal(y_aug[:, C8:C8 + 1], approx=True)            # (TQ, 1)
    y_ref[0] = (y_aug[:, :C8] * inv_l).astype(y_ref.dtype)


# ---------------------------------------------------------------------------
# Stage 2: W (1x1 conv C/8 -> C) + AdaIN(x0, W_y), per batch element.
# ---------------------------------------------------------------------------
def _w_adain_kernel(x0_ref, yv_ref, ww_ref, bw_ref, z_ref):
    eps = 1e-5
    x0 = x0_ref[0]                            # (C, HW)  f32 content
    yv = yv_ref[0]                            # (C8, HW) bf16 torch-viewed y

    wy = (jnp.dot(ww_ref[...], yv, preferred_element_type=jnp.float32)
          + bw_ref[...])                      # (C, HW)

    n = x0.shape[-1]
    inv_n = 1.0 / n
    inv_nm1 = 1.0 / max(n - 1, 1)             # unbiased variance (static)

    # One-pass per-channel instance stats (sum + sum-of-squares).
    c_sum = jnp.sum(x0, axis=-1, keepdims=True)
    c_ssq = jnp.sum(x0 * x0, axis=-1, keepdims=True)
    s_sum = jnp.sum(wy, axis=-1, keepdims=True)
    s_ssq = jnp.sum(wy * wy, axis=-1, keepdims=True)
    c_mean = c_sum * inv_n
    s_mean = s_sum * inv_n
    c_var = jnp.maximum((c_ssq - c_sum * c_mean) * inv_nm1, 0.0)
    s_var = jnp.maximum((s_ssq - s_sum * s_mean) * inv_nm1, 0.0)

    # rsqrt (EUP) + multiply instead of sqrt followed by full-tile divides.
    scale = lax.rsqrt(c_var + eps) * jnp.sqrt(s_var + eps)             # (C, 1)
    z_ref[0] = ((x0 - c_mean) * scale + s_mean).astype(z_ref.dtype)


# ---------------------------------------------------------------------------
# Wrapper.
# ---------------------------------------------------------------------------
def cross_attention_block(x0, x1, params):
    """x0, x1: (B, C, H, W) NCHW, like the PyTorch module's x[0], x[1]."""
    B, C, H, W = x0.shape
    C8 = C // 8
    HW = H * W
    wg, bg, wt, bt, wp, bp, ww, bw = params   # conv weights in torch (out, in) layout

    kind = _device_kind()
    exp_bf16 = _exp_in_bf16(kind)
    TQ = _pick_query_tile(HW)
    NQ = HW // TQ

    # NCHW-native flattening: channels on sublanes, spatial on the 128-wide
    # lane axis (free reshape, no XLA transposes of the big x tensors).
    x0f = x0.reshape(B, C, HW)
    x1f = x1.reshape(B, C, HW)

    # Augment g's weight with a zero row + bias 1.0 -> ones-row for free.
    wg_aug = jnp.concatenate([wg, jnp.zeros((1, C), wg.dtype)], axis=0).astype(jnp.bfloat16)
    bg_aug = jnp.concatenate([bg, jnp.ones((1, 1), bg.dtype)], axis=0)
    wt_b = wt.astype(jnp.bfloat16)
    wp_b = wp.astype(jnp.bfloat16)
    ww_b = ww.astype(jnp.bfloat16)

    feat = lambda rows, cols, cmap: pl.BlockSpec((1, rows, cols), cmap)

    # --- Stage 1: attention over a (batch, query-tile) parallel grid. -------
    s1_bytes = ((2 * C * HW * 4)          # x0 + x1 blocks (resident)
                + (C * TQ * 4)            # x1 query-column block
                + (TQ * C8 * 2)) * 2 \
               + TQ * HW * 6 + (3 * C8 + 2) * HW * 4   # f(f32)+p(bf16)+projections
    s1_params = pltpu.CompilerParams(
        dimension_semantics=("parallel", "parallel"),
        vmem_limit_bytes=_vmem_limit(kind, s1_bytes))

    # y is emitted bf16 in (B, HW, C8) - the exact memory image of torch's
    # contiguous matmul output - so the .view() below is a free reshape.
    y = pl.pallas_call(
        functools.partial(_attn_kernel, exp_bf16=exp_bf16),
        out_shape=jax.ShapeDtypeStruct((B, HW, C8), jnp.bfloat16),
        grid=(B, NQ),
        in_specs=[
            feat(C, HW, lambda b, q: (b, 0, 0)),     # x0 (values for g)
            feat(C, HW, lambda b, q: (b, 0, 0)),     # x1 (keys for theta)
            feat(C, TQ, lambda b, q: (b, 0, q)),     # x1 query columns (phi)
            pl.BlockSpec((C8 + 1, C), lambda b, q: (0, 0)),
            pl.BlockSpec((C8 + 1, 1), lambda b, q: (0, 0)),
            pl.BlockSpec((C8, C), lambda b, q: (0, 0)),
            pl.BlockSpec((C8, 1), lambda b, q: (0, 0)),
            pl.BlockSpec((C8, C), lambda b, q: (0, 0)),
            pl.BlockSpec((C8, 1), lambda b, q: (0, 0)),
        ],
        out_specs=pl.BlockSpec((1, TQ, C8), lambda b, q: (b, q, 0)),
        compiler_params=s1_params,
    )(x0f, x1f, x1f, wg_aug, bg_aug, wt_b, bt, wp_b, bp)

    # torch: y.view(B, C//8, H, W) on the contiguous (B, HW, C8) buffer = raw
    # reinterpretation (NOT a permute).  (B, HW, C8) -> (B, C8, HW) is a free
    # bitcast reshape; any "fix" of the view on the PyTorch side breaks parity.
    y_view = y.reshape(B, C8, HW)

    # --- Stage 2: W projection + AdaIN, lane-dense throughout. --------------
    s2_bytes = (C * HW * 4 + C8 * HW * 2 + C * HW * 4) * 2 + C * HW * 4
    s2_params = pltpu.CompilerParams(
        dimension_semantics=("parallel",),
        vmem_limit_bytes=_vmem_limit(kind, s2_bytes))
    z = pl.pallas_call(
        _w_adain_kernel,
        out_shape=jax.ShapeDtypeStruct((B, C, HW), jnp.float32),
        grid=(B,),
        in_specs=[
            feat(C, HW, lambda b: (b, 0, 0)),
            feat(C8, HW, lambda b: (b, 0, 0)),
            pl.BlockSpec((C, C8), lambda b: (0, 0)),
            pl.BlockSpec((C, 1), lambda b: (0, 0)),
        ],
        out_specs=feat(C, HW, lambda b: (b, 0, 0)),
        compiler_params=s2_params,
    )(x0f, y_view, ww_b, bw)

    return z.reshape(B, C, H, W)


if __name__ == "__main__":
    key = jax.random.PRNGKey(0)
    B, C, H, W = 2, 32, 16, 16        # in_channels=32 -> C//8 = 4, HW = 256
    C8 = C // 8
    k = jax.random.split(key, 6)

    x0 = jax.random.normal(k[0], (B, C, H, W), jnp.float32)
    x1 = jax.random.normal(k[1], (B, C, H, W), jnp.float32)

    def c2_xavier(key, shape):
        # stand-in for c2_xavier_fill (kaiming_uniform a=1, zero bias);
        # conv weight layout (out_channels, in_channels) -> fan_in = shape[1].
        fan_in = shape[1]
        bound = (3.0 / fan_in) ** 0.5
        return jax.random.uniform(key, shape, jnp.float32, -bound, bound)

    wg = c2_xavier(k[2], (C8, C)); bg = jnp.zeros((C8, 1), jnp.float32)
    wt = c2_xavier(k[3], (C8, C)); bt = jnp.zeros((C8, 1), jnp.float32)
    wp = c2_xavier(k[4], (C8, C)); bp = jnp.zeros((C8, 1), jnp.float32)
    ww = c2_xavier(k[5], (C, C8)); bw = jnp.zeros((C, 1), jnp.float32)

    fn = jax.jit(cross_attention_block)
    z = fn(x0, x1, (wg, bg, wt, bt, wp, bp, ww, bw))
    jax.block_until_ready(z)
    assert z.shape == (B, C, H, W) and z.dtype == jnp.float32
    print("KERNEL_OK")
</pallas_src>

<mosaic_0001>
module attributes {stable_mosaic.version = 11 : i64} {
  func.func @_attn_kernel(%arg0: i32, %arg1: i32, %arg2: memref<1x32x256xf32, #tpu.memory_space<vmem>>, %arg3: memref<1x32x256xf32, #tpu.memory_space<vmem>>, %arg4: memref<1x32x256xf32, #tpu.memory_space<vmem>>, %arg5: memref<5x32xbf16, #tpu.memory_space<vmem>>, %arg6: memref<5x1xf32, #tpu.memory_space<vmem>>, %arg7: memref<4x32xbf16, #tpu.memory_space<vmem>>, %arg8: memref<4x1xf32, #tpu.memory_space<vmem>>, %arg9: memref<4x32xbf16, #tpu.memory_space<vmem>>, %arg10: memref<4x1xf32, #tpu.memory_space<vmem>>, %arg11: memref<1x256x4xbf16, #tpu.memory_space<vmem>>) attributes {dimension_semantics = [#tpu.dimension_semantics<parallel>, #tpu.dimension_semantics<parallel>], iteration_bounds = array<i64: 2, 1>, scalar_prefetch = 0 : i64, scratch_operands = 0 : i64, tpu.core_type = #tpu.core_type<tc>, window_params = [{transform_indices = @transform_0, window_bounds = array<i64: 1, 32, 256>}, {transform_indices = @transform_1, window_bounds = array<i64: 1, 32, 256>}, {transform_indices = @transform_2, window_bounds = array<i64: 1, 32, 256>}, {pipeline_mode = #tpu.pipeline_mode<synchronous>, transform_indices = @transform_3, window_bounds = array<i64: 5, 32>}, {pipeline_mode = #tpu.pipeline_mode<synchronous>, transform_indices = @transform_4, window_bounds = array<i64: 5, 1>}, {pipeline_mode = #tpu.pipeline_mode<synchronous>, transform_indices = @transform_5, window_bounds = array<i64: 4, 32>}, {pipeline_mode = #tpu.pipeline_mode<synchronous>, transform_indices = @transform_6, window_bounds = array<i64: 4, 1>}, {pipeline_mode = #tpu.pipeline_mode<synchronous>, transform_indices = @transform_7, window_bounds = array<i64: 4, 32>}, {pipeline_mode = #tpu.pipeline_mode<synchronous>, transform_indices = @transform_8, window_bounds = array<i64: 4, 1>}, {transform_indices = @transform_9, window_bounds = array<i64: 1, 256, 4>}]} {
    %c0 = arith.constant 0 : index
    %c0_0 = arith.constant 0 : index
    %c0_1 = arith.constant 0 : index
    %0 = vector.load %arg2[%c0, %c0_0, %c0_1] : memref<1x32x256xf32, #tpu.memory_space<vmem>>, vector<1x32x256xf32>
    %1 = vector.shape_cast %0 : vector<1x32x256xf32> to vector<32x256xf32>
    %2 = arith.truncf %1 : vector<32x256xf32> to vector<32x256xbf16>
    %c0_2 = arith.constant 0 : index
    %c0_3 = arith.constant 0 : index
    %c0_4 = arith.constant 0 : index
    %3 = vector.load %arg3[%c0_2, %c0_3, %c0_4] : memref<1x32x256xf32, #tpu.memory_space<vmem>>, vector<1x32x256xf32>
    %4 = vector.shape_cast %3 : vector<1x32x256xf32> to vector<32x256xf32>
    %5 = arith.truncf %4 : vector<32x256xf32> to vector<32x256xbf16>
    %c0_5 = arith.constant 0 : index
    %c0_6 = arith.constant 0 : index
    %c0_7 = arith.constant 0 : index
    %6 = vector.load %arg4[%c0_5, %c0_6, %c0_7] : memref<1x32x256xf32, #tpu.memory_space<vmem>>, vector<1x32x256xf32>
    %7 = vector.shape_cast %6 : vector<1x32x256xf32> to vector<32x256xf32>
    %8 = arith.truncf %7 : vector<32x256xf32> to vector<32x256xbf16>
    %c0_8 = arith.constant 0 : index
    %c0_9 = arith.constant 0 : index
    %9 = vector.load %arg5[%c0_8, %c0_9] : memref<5x32xbf16, #tpu.memory_space<vmem>>, vector<5x32xbf16>
    %cst = arith.constant dense<0.000000e+00> : vector<5x256xf32>
    %10 = tpu.matmul %9, %2, %cst {dimension_numbers = #tpu.dot_dimension_numbers<[1], [0], [0], [1], [0, 0, 1, 1], [], []>} : vector<5x32xbf16>, vector<32x256xbf16>, vector<5x256xf32> -> vector<5x256xf32>
    %c0_10 = arith.constant 0 : index
    %c0_11 = arith.constant 0 : index
    %11 = vector.load %arg6[%c0_10, %c0_11] : memref<5x1xf32, #tpu.memory_space<vmem>>, vector<5x1xf32>
    %12 = vector.broadcast %11 : vector<5x1xf32> to vector<5x256xf32>
    %13 = arith.addf %10, %12 : vector<5x256xf32>
    %14 = arith.truncf %13 : vector<5x256xf32> to vector<5x256xbf16>
    %c0_12 = arith.constant 0 : index
    %c0_13 = arith.constant 0 : index
    %15 = vector.load %arg7[%c0_12, %c0_13] : memref<4x32xbf16, #tpu.memory_space<vmem>>, vector<4x32xbf16>
    %cst_14 = arith.constant dense<0.000000e+00> : vector<4x256xf32>
    %16 = tpu.matmul %15, %5, %cst_14 {dimension_numbers = #tpu.dot_dimension_numbers<[1], [0], [0], [1], [0, 0, 1, 1], [], []>} : vector<4x32xbf16>, vector<32x256xbf16>, vector<4x256xf32> -> vector<4x256xf32>
    %c0_15 = arith.constant 0 : index
    %c0_16 = arith.constant 0 : index
    %17 = vector.load %arg8[%c0_15, %c0_16] : memref<4x1xf32, #tpu.memory_space<vmem>>, vector<4x1xf32>
    %18 = vector.broadcast %17 : vector<4x1xf32> to vector<4x256xf32>
    %19 = arith.addf %16, %18 : vector<4x256xf32>
    %20 = arith.truncf %19 : vector<4x256xf32> to vector<4x256xbf16>
    %c0_17 = arith.constant 0 : index
    %c0_18 = arith.constant 0 : index
    %21 = vector.load %arg9[%c0_17, %c0_18] : memref<4x32xbf16, #tpu.memory_space<vmem>>, vector<4x32xbf16>
    %cst_19 = arith.constant dense<0.000000e+00> : vector<4x256xf32>
    %22 = tpu.matmul %21, %8, %cst_19 {dimension_numbers = #tpu.dot_dimension_numbers<[1], [0], [0], [1], [0, 0, 1, 1], [], []>} : vector<4x32xbf16>, vector<32x256xbf16>, vector<4x256xf32> -> vector<4x256xf32>
    %c0_20 = arith.constant 0 : index
    %c0_21 = arith.constant 0 : index
    %23 = vector.load %arg10[%c0_20, %c0_21] : memref<4x1xf32, #tpu.memory_space<vmem>>, vector<4x1xf32>
    %24 = vector.broadcast %23 : vector<4x1xf32> to vector<4x256xf32>
    %25 = arith.addf %22, %24 : vector<4x256xf32>
    %26 = arith.truncf %25 : vector<4x256xf32> to vector<4x256xbf16>
    %cst_22 = arith.constant dense<0.000000e+00> : vector<256x256xf32>
    %27 = tpu.matmul %26, %20, %cst_22 {dimension_numbers = #tpu.dot_dimension_numbers<[0], [0], [1], [1], [0, 1, 1, 1], [], []>} : vector<4x256xbf16>, vector<4x256xbf16>, vector<256x256xf32> -> vector<256x256xf32>
    %cst_23 = arith.constant dense<0xFF800000> : vector<256xf32>
    %28 = vector.multi_reduction <maximumf>, %27, %cst_23 [1] : vector<256x256xf32> to vector<256xf32>
    %29 = vector.shape_cast %28 : vector<256xf32> to vector<256x1xf32>
    %30 = vector.broadcast %29 : vector<256x1xf32> to vector<256x256xf32>
    %31 = arith.subf %27, %30 : vector<256x256xf32>
    %32 = math.exp %31 : vector<256x256xf32>
    %33 = arith.truncf %32 : vector<256x256xf32> to vector<256x256xbf16>
    %cst_24 = arith.constant dense<0.000000e+00> : vector<256x5xf32>
    %34 = tpu.matmul %33, %14, %cst_24 {dimension_numbers = #tpu.dot_dimension_numbers<[1], [1], [0], [0], [0, 0, 1, 0], [], []>} : vector<256x256xbf16>, vector<5x256xbf16>, vector<256x5xf32> -> vector<256x5xf32>
    %35 = vector.extract_strided_slice %34 {offsets = [0, 4], sizes = [256, 1], strides = [1, 1]} : vector<256x5xf32> to vector<256x1xf32>
    %36 = tpu.reciprocal %35 {approx = true} : vector<256x1xf32> -> vector<256x1xf32>
    %37 = vector.extract_strided_slice %34 {offsets = [0, 0], sizes = [256, 4], strides = [1, 1]} : vector<256x5xf32> to vector<256x4xf32>
    %38 = vector.broadcast %36 : vector<256x1xf32> to vector<256x4xf32>
    %39 = arith.mulf %37, %38 : vector<256x4xf32>
    %40 = arith.truncf %39 : vector<256x4xf32> to vector<256x4xbf16>
    %c0_25 = arith.constant 0 : index
    %c0_26 = arith.constant 0 : index
    %c0_27 = arith.constant 0 : index
    %41 = vector.load %arg11[%c0_25, %c0_26, %c0_27] : memref<1x256x4xbf16, #tpu.memory_space<vmem>>, vector<1x256x4xbf16>
    %42 = vector.shape_cast %41 : vector<1x256x4xbf16> to vector<256x4xbf16>
    %43 = vector.shape_cast %40 : vector<256x4xbf16> to vector<1x256x4xbf16>
    tpu.vector_store %arg11[%c0_25, %c0_26, %c0_27], %43 {strides = array<i32>} : memref<1x256x4xbf16, #tpu.memory_space<vmem>>, vector<1x256x4xbf16>,
    return
  }
  func.func @transform_0(%arg0: i32, %arg1: i32) -> (i32, i32, i32) {
    %c0_i32 = arith.constant 0 : i32
    %c0_i32_0 = arith.constant 0 : i32
    %c0_i32_1 = arith.constant 0 : i32
    return %arg0, %c0_i32, %c0_i32_0 : i32, i32, i32
  }
  func.func @transform_1(%arg0: i32, %arg1: i32) -> (i32, i32, i32) {
    %c0_i32 = arith.constant 0 : i32
    %c0_i32_0 = arith.constant 0 : i32
    %c0_i32_1 = arith.constant 0 : i32
    return %arg0, %c0_i32, %c0_i32_0 : i32, i32, i32
  }
  func.func @transform_2(%arg0: i32, %arg1: i32) -> (i32, i32, i32) {
    %c0_i32 = arith.constant 0 : i32
    %c0_i32_0 = arith.constant 0 : i32
    return %arg0, %c0_i32, %arg1 : i32, i32, i32
  }
  func.func @transform_3(%arg0: i32, %arg1: i32) -> (i32, i32) {
    %c0_i32 = arith.constant 0 : i32
    %c0_i32_0 = arith.constant 0 : i32
    %c0_i32_1 = arith.constant 0 : i32
    return %c0_i32, %c0_i32_0 : i32, i32
  }
  func.func @transform_4(%arg0: i32, %arg1: i32) -> (i32, i32) {
    %c0_i32 = arith.constant 0 : i32
    %c0_i32_0 = arith.constant 0 : i32
    %c0_i32_1 = arith.constant 0 : i32
    return %c0_i32, %c0_i32_0 : i32, i32
  }
  func.func @transform_5(%arg0: i32, %arg1: i32) -> (i32, i32) {
    %c0_i32 = arith.constant 0 : i32
    %c0_i32_0 = arith.constant 0 : i32
    %c0_i32_1 = arith.constant 0 : i32
    return %c0_i32, %c0_i32_0 : i32, i32
  }
  func.func @transform_6(%arg0: i32, %arg1: i32) -> (i32, i32) {
    %c0_i32 = arith.constant 0 : i32
    %c0_i32_0 = arith.constant 0 : i32
    %c0_i32_1 = arith.constant 0 : i32
    return %c0_i32, %c0_i32_0 : i32, i32
  }
  func.func @transform_7(%arg0: i32, %arg1: i32) -> (i32, i32) {
    %c0_i32 = arith.constant 0 : i32
    %c0_i32_0 = arith.constant 0 : i32
    %c0_i32_1 = arith.constant 0 : i32
    return %c0_i32, %c0_i32_0 : i32, i32
  }
  func.func @transform_8(%arg0: i32, %arg1: i32) -> (i32, i32) {
    %c0_i32 = arith.constant 0 : i32
    %c0_i32_0 = arith.constant 0 : i32
    %c0_i32_1 = arith.constant 0 : i32
    return %c0_i32, %c0_i32_0 : i32, i32
  }
  func.func @transform_9(%arg0: i32, %arg1: i32) -> (i32, i32, i32) {
    %c0_i32 = arith.constant 0 : i32
    %c0_i32_0 = arith.constant 0 : i32
    return %arg0, %arg1, %c0_i32 : i32, i32, i32
  }
}

module attributes {stable_mosaic.version = 11 : i64} {
  func.func @_w_adain_kernel(%arg0: i32, %arg1: memref<1x32x256xf32, #tpu.memory_space<vmem>>, %arg2: memref<1x4x256xbf16, #tpu.memory_space<vmem>>, %arg3: memref<32x4xbf16, #tpu.memory_space<vmem>>, %arg4: memref<32x1xf32, #tpu.memory_space<vmem>>, %arg5: memref<1x32x256xf32, #tpu.memory_space<vmem>>) attributes {dimension_semantics = [#tpu.dimension_semantics<parallel>], iteration_bounds = array<i64: 2>, scalar_prefetch = 0 : i64, scratch_operands = 0 : i64, tpu.core_type = #tpu.core_type<tc>, window_params = [{transform_indices = @transform_0, window_bounds = array<i64: 1, 32, 256>}, {transform_indices = @transform_1, window_bounds = array<i64: 1, 4, 256>}, {pipeline_mode = #tpu.pipeline_mode<synchronous>, transform_indices = @transform_2, window_bounds = array<i64: 32, 4>}, {pipeline_mode = #tpu.pipeline_mode<synchronous>, transform_indices = @transform_3, window_bounds = array<i64: 32, 1>}, {transform_indices = @transform_4, window_bounds = array<i64: 1, 32, 256>}]} {
    %c0 = arith.constant 0 : index
    %c0_0 = arith.constant 0 : index
    %c0_1 = arith.constant 0 : index
    %0 = vector.load %arg1[%c0, %c0_0, %c0_1] : memref<1x32x256xf32, #tpu.memory_space<vmem>>, vector<1x32x256xf32>
    %1 = vector.shape_cast %0 : vector<1x32x256xf32> to vector<32x256xf32>
    %c0_2 = arith.constant 0 : index
    %c0_3 = arith.constant 0 : index
    %c0_4 = arith.constant 0 : index
    %2 = vector.load %arg2[%c0_2, %c0_3, %c0_4] : memref<1x4x256xbf16, #tpu.memory_space<vmem>>, vector<1x4x256xbf16>
    %3 = vector.shape_cast %2 : vector<1x4x256xbf16> to vector<4x256xbf16>
    %c0_5 = arith.constant 0 : index
    %c0_6 = arith.constant 0 : index
    %4 = vector.load %arg3[%c0_5, %c0_6] : memref<32x4xbf16, #tpu.memory_space<vmem>>, vector<32x4xbf16>
    %cst = arith.constant dense<0.000000e+00> : vector<32x256xf32>
    %5 = tpu.matmul %4, %3, %cst {dimension_numbers = #tpu.dot_dimension_numbers<[1], [0], [0], [1], [0, 0, 1, 1], [], []>} : vector<32x4xbf16>, vector<4x256xbf16>, vector<32x256xf32> -> vector<32x256xf32>
    %c0_7 = arith.constant 0 : index
    %c0_8 = arith.constant 0 : index
    %6 = vector.load %arg4[%c0_7, %c0_8] : memref<32x1xf32, #tpu.memory_space<vmem>>, vector<32x1xf32>
    %7 = vector.broadcast %6 : vector<32x1xf32> to vector<32x256xf32>
    %8 = arith.addf %5, %7 : vector<32x256xf32>
    %cst_9 = arith.constant dense<0.000000e+00> : vector<32xf32>
    %9 = vector.multi_reduction <add>, %1, %cst_9 [1] : vector<32x256xf32> to vector<32xf32>
    %10 = vector.shape_cast %9 : vector<32xf32> to vector<32x1xf32>
    %11 = arith.mulf %1, %1 : vector<32x256xf32>
    %cst_10 = arith.constant dense<0.000000e+00> : vector<32xf32>
    %12 = vector.multi_reduction <add>, %11, %cst_10 [1] : vector<32x256xf32> to vector<32xf32>
    %13 = vector.shape_cast %12 : vector<32xf32> to vector<32x1xf32>
    %cst_11 = arith.constant dense<0.000000e+00> : vector<32xf32>
    %14 = vector.multi_reduction <add>, %8, %cst_11 [1] : vector<32x256xf32> to vector<32xf32>
    %15 = vector.shape_cast %14 : vector<32xf32> to vector<32x1xf32>
    %16 = arith.mulf %8, %8 : vector<32x256xf32>
    %cst_12 = arith.constant dense<0.000000e+00> : vector<32xf32>
    %17 = vector.multi_reduction <add>, %16, %cst_12 [1] : vector<32x256xf32> to vector<32xf32>
    %18 = vector.shape_cast %17 : vector<32xf32> to vector<32x1xf32>
    %cst_13 = arith.constant 3.906250e-03 : f32
    %19 = vector.broadcast %cst_13 : f32 to vector<32x1xf32>
    %20 = arith.mulf %10, %19 : vector<32x1xf32>
    %cst_14 = arith.constant 3.906250e-03 : f32
    %21 = vector.broadcast %cst_14 : f32 to vector<32x1xf32>
    %22 = arith.mulf %15, %21 : vector<32x1xf32>
    %23 = arith.mulf %10, %20 : vector<32x1xf32>
    %24 = arith.subf %13, %23 : vector<32x1xf32>
    %cst_15 = arith.constant 0.00392156886 : f32
    %25 = vector.broadcast %cst_15 : f32 to vector<32x1xf32>
    %26 = arith.mulf %24, %25 : vector<32x1xf32>
    %cst_16 = arith.constant 0.000000e+00 : f32
    %27 = vector.broadcast %cst_16 : f32 to vector<32x1xf32>
    %28 = arith.maximumf %26, %27 : vector<32x1xf32>
    %29 = arith.mulf %15, %22 : vector<32x1xf32>
    %30 = arith.subf %18, %29 : vector<32x1xf32>
    %cst_17 = arith.constant 0.00392156886 : f32
    %31 = vector.broadcast %cst_17 : f32 to vector<32x1xf32>
    %32 = arith.mulf %30, %31 : vector<32x1xf32>
    %cst_18 = arith.constant 0.000000e+00 : f32
    %33 = vector.broadcast %cst_18 : f32 to vector<32x1xf32>
    %34 = arith.maximumf %32, %33 : vector<32x1xf32>
    %cst_19 = arith.constant 9.99999974E-6 : f32
    %35 = vector.broadcast %cst_19 : f32 to vector<32x1xf32>
    %36 = arith.addf %28, %35 : vector<32x1xf32>
    %37 = math.rsqrt %36 : vector<32x1xf32>
    %cst_20 = arith.constant 9.99999974E-6 : f32
    %38 = vector.broadcast %cst_20 : f32 to vector<32x1xf32>
    %39 = arith.addf %34, %38 : vector<32x1xf32>
    %40 = math.sqrt %39 : vector<32x1xf32>
    %41 = arith.mulf %37, %40 : vector<32x1xf32>
    %42 = vector.broadcast %20 : vector<32x1xf32> to vector<32x256xf32>
    %43 = arith.subf %1, %42 : vector<32x256xf32>
    %44 = vector.broadcast %41 : vector<32x1xf32> to vector<32x256xf32>
    %45 = arith.mulf %43, %44 : vector<32x256xf32>
    %46 = vector.broadcast %22 : vector<32x1xf32> to vector<32x256xf32>
    %47 = arith.addf %45, %46 : vector<32x256xf32>
    %c0_21 = arith.constant 0 : index
    %c0_22 = arith.constant 0 : index
    %c0_23 = arith.constant 0 : index
    %48 = vector.load %arg5[%c0_21, %c0_22, %c0_23] : memref<1x32x256xf32, #tpu.memory_space<vmem>>, vector<1x32x256xf32>
    %49 = vector.shape_cast %48 : vector<1x32x256xf32> to vector<32x256xf32>
    %50 = vector.shape_cast %47 : vector<32x256xf32> to vector<1x32x256xf32>
    tpu.vector_store %arg5[%c0_21, %c0_22, %c0_23], %50 {strides = array<i32>} : memref<1x32x256xf32, #tpu.memory_space<vmem>>, vector<1x32x256xf32>,
    return
  }
  func.func @transform_0(%arg0: i32) -> (i32, i32, i32) {
    %c0_i32 = arith.constant 0 : i32
    %c0_i32_0 = arith.constant 0 : i32
    %c0_i32_1 = arith.constant 0 : i32
    return %arg0, %c0_i32, %c0_i32_0 : i32, i32, i32
  }
  func.func @transform_1(%arg0: i32) -> (i32, i32, i32) {
    %c0_i32 = arith.constant 0 : i32
    %c0_i32_0 = arith.constant 0 : i32
    %c0_i32_1 = arith.constant 0 : i32
    return %arg0, %c0_i32, %c0_i32_0 : i32, i32, i32
  }
  func.func @transform_2(%arg0: i32) -> (i32, i32) {
    %c0_i32 = arith.constant 0 : i32
    %c0_i32_0 = arith.constant 0 : i32
    %c0_i32_1 = arith.constant 0 : i32
    return %c0_i32, %c0_i32_0 : i32, i32
  }
  func.func @transform_3(%arg0: i32) -> (i32, i32) {
    %c0_i32 = arith.constant 0 : i32
    %c0_i32_0 = arith.constant 0 : i32
    %c0_i32_1 = arith.constant 0 : i32
    return %c0_i32, %c0_i32_0 : i32, i32
  }
  func.func @transform_4(%arg0: i32) -> (i32, i32, i32) {
    %c0_i32 = arith.constant 0 : i32
    %c0_i32_0 = arith.constant 0 : i32
    %c0_i32_1 = arith.constant 0 : i32
    return %arg0, %c0_i32, %c0_i32_0 : i32, i32, i32
  }
}

</mosaic_0001>

<llo_original>
// kernel: cross_attention_block.3
$region0: #{cross_attention_block.3}
  #allocation0 [shape = 'u32[]', space=smem, size = 0x4, offset = 0x4, fixed_abs, tag = 'smem constant byte address 0x4 - core index']
  #allocation1 [shape = 'u32[144,128]{1,0:T(1,128)}', space=vmem, size = 0x12000, scoped, tag = 'internal scratch']
  %s0 = inlined_call_operand.vmem [shape: f32[2,32,256], index: 0, kind: input, shape index: {}]
  %s1 = inlined_call_operand.vmem [shape: bf16[2,4,256], index: 1, kind: input, shape index: {}]
  %s2 = inlined_call_operand.vmem [shape: bf16[32,4], index: 2, kind: input, shape index: {}]
  %s3 = inlined_call_operand.vmem [shape: f32[32,1], index: 3, kind: input, shape index: {}]
  %s4 = inlined_call_operand.vmem [shape: f32[2,32,256], index: 4, kind: output, shape index: {}]
  %s5 = sld [smem:[#allocation0]]
  $region49: #{cross_attention_block.3} parent=0
    _
  %s7 = ssub.s32 1, %s5
  %s8 = scalar_select 0, %s7, %s5
  loop: start=0, step=1, limit=4
  $region2: #{cross_attention_block.3} parent=0 // loop_pre_header
    _
  $region3: #{cross_attention_block.3} parent=0 // loop_header
    %s10 = sphi 0, %s14
    %p11 = scmp.ge.s32.totalorder %s10, 4
    %s20 = sphi 0, %s22
    %s23 = sphi 0, %s20
    %s24 = sphi 0, %s23
    %s40 = sphi 0, %s24
    %s46 = sphi 0, %s48
    %s49 = sphi 0, %s46
    %s50 = sphi 0, %s49
    %s66 = sphi 0, %s50
    %s70 = sphi 0, %s70
    %s72 = sphi 0, %s70
    %s73 = sphi 0, %s72
    %s87 = sphi 0, %s73
    %s91 = sphi 0, %s91
    %s93 = sphi 0, %s91
    %s94 = sphi 0, %s93
    %s108 = sphi 0, %s94
    %s114 = sphi 0, %s116
    %s117 = sphi 0, %s114
    %s118 = sphi 0, %s117
    %s134 = sphi 0, %s118
  $region4: #{cross_attention_block.3} parent=0 // loop_header_branch
    %13 = sbr.rel (%p11) target = $region8
  $region5: #{cross_attention_block.3} parent=0 // loop_body
    %s15 = ssub.s32 %s10, 1
    %s16 = ssub.s32 %s10, 2
    %s17 = sadd.s32 %s10, 1
    %s18 = ssub.s32 %s10, %s17
    %p19 = scmp.eq.s32.totalorder %s18, 0
    %s21 = sadd.s32 %s20, 1
    %s22 = scalar_select %p19, %s20, %s21
    %p25 = pneg %p19
    %p26 = scmp.eq.s32.totalorder %s10, 1
    %p27 = por %p25, %p26
    %p28 = scmp.ne.s32.totalorder %s20, %s23
    %p29 = scmp.eq.s32.totalorder %s10, 0
    %p30 = por %p28, %p29
    %p31 = scmp.ne.s32.totalorder %s20, %s23
    %p32 = scmp.eq.s32.totalorder %s15, 1
    %p33 = por %p31, %p32
    %p34 = scmp.ne.s32.totalorder %s23, %s24
    %p35 = scmp.eq.s32.totalorder %s15, 0
    %p36 = por %p34, %p35
    %p37 = scmp.ne.s32.totalorder %s23, %s24
    %p38 = scmp.eq.s32.totalorder %s16, 1
    %p39 = por %p37, %p38
    %p41 = scmp.ne.s32.totalorder %s24, %s40
    %p42 = scmp.eq.s32.totalorder %s16, 0
    %p43 = por %p41, %p42
    %s44 = ssub.s32 %s10, %s17
    %p45 = scmp.eq.s32.totalorder %s44, 0
    %s47 = sadd.s32 %s46, 1
    %s48 = scalar_select %p45, %s46, %s47
    %p51 = pneg %p45
    %p52 = scmp.eq.s32.totalorder %s10, 1
    %p53 = por %p51, %p52
    %p54 = scmp.ne.s32.totalorder %s46, %s49
    %p55 = scmp.eq.s32.totalorder %s10, 0
    %p56 = por %p54, %p55
    %p57 = scmp.ne.s32.totalorder %s46, %s49
    %p58 = scmp.eq.s32.totalorder %s15, 1
    %p59 = por %p57, %p58
    %p60 = scmp.ne.s32.totalorder %s49, %s50
    %p61 = scmp.eq.s32.totalorder %s15, 0
    %p62 = por %p60, %p61
    %p63 = scmp.ne.s32.totalorder %s49, %s50
    %p64 = scmp.eq.s32.totalorder %s16, 1
    %p65 = por %p63, %p64
    %p67 = scmp.ne.s32.totalorder %s50, %s66
    %p68 = scmp.eq.s32.totalorder %s16, 0
    %p69 = por %p67, %p68
    %s71 = sadd.s32 %s70, 1
    %p74 = scmp.eq.s32.totalorder %s10, 1
    %p75 = scmp.ne.s32.totalorder %s70, %s72
    %p76 = scmp.eq.s32.totalorder %s10, 0
    %p77 = por %p75, %p76
    %p78 = scmp.ne.s32.totalorder %s70, %s72
    %p79 = scmp.eq.s32.totalorder %s15, 1
    %p80 = por %p78, %p79
    %p81 = scmp.ne.s32.totalorder %s72, %s73
    %p82 = scmp.eq.s32.totalorder %s15, 0
    %p83 = por %p81, %p82
    %p84 = scmp.ne.s32.totalorder %s72, %s73
    %p85 = scmp.eq.s32.totalorder %s16, 1
    %p86 = por %p84, %p85
    %p88 = scmp.ne.s32.totalorder %s73, %s87
    %p89 = scmp.eq.s32.totalorder %s16, 0
    %p90 = por %p88, %p89
    %s92 = sadd.s32 %s91, 1
    %p95 = scmp.eq.s32.totalorder %s10, 1
    %p96 = scmp.ne.s32.totalorder %s91, %s93
    %p97 = scmp.eq.s32.totalorder %s10, 0
    %p98 = por %p96, %p97
    %p99 = scmp.ne.s32.totalorder %s91, %s93
    %p100 = scmp.eq.s32.totalorder %s15, 1
    %p101 = por %p99, %p100
    %p102 = scmp.ne.s32.totalorder %s93, %s94
    %p103 = scmp.eq.s32.totalorder %s15, 0
    %p104 = por %p102, %p103
    %p105 = scmp.ne.s32.totalorder %s93, %s94
    %p106 = scmp.eq.s32.totalorder %s16, 1
    %p107 = por %p105, %p106
    %p109 = scmp.ne.s32.totalorder %s94, %s108
    %p110 = scmp.eq.s32.totalorder %s16, 0
    %p111 = por %p109, %p110
    %s112 = ssub.s32 %s10, %s17
    %p113 = scmp.eq.s32.totalorder %s112, 0
    %s115 = sadd.s32 %s114, 1
    %s116 = scalar_select %p113, %s114, %s115
    %p119 = pneg %p113
    %p120 = scmp.eq.s32.totalorder %s10, 1
    %p121 = por %p119, %p120
    %p122 = scmp.ne.s32.totalorder %s114, %s117
    %p123 = scmp.eq.s32.totalorder %s10, 0
    %p124 = por %p122, %p123
    %p125 = scmp.ne.s32.totalorder %s114, %s117
    %p126 = scmp.eq.s32.totalorder %s15, 1
    %p127 = por %p125, %p126
    %p128 = scmp.ne.s32.totalorder %s117, %s118
    %p129 = scmp.eq.s32.totalorder %s15, 0
    %p130 = por %p128, %p129
    %p131 = scmp.ne.s32.totalorder %s117, %s118
    %p132 = scmp.eq.s32.totalorder %s16, 1
    %p133 = por %p131, %p132
    %p135 = scmp.ne.s32.totalorder %s118, %s134
    %p136 = scmp.eq.s32.totalorder %s16, 0
    %p137 = por %p135, %p136
    %p138 = scmp.le.s32.totalorder 1, %s10
    %p139 = scmp.lt.s32.totalorder %s10, 3
    %p140 = pnand %p138, %p139
    %p141 = pneg %p140
    // Predicated region
    $region9: #{cross_attention_block.3} parent=5 // pred_check
      _
    $region10: #{cross_attention_block.3} parent=5 // pred_check_branch
      %143 = sbr.rel (%p140) target = $region12
    $region11: #{cross_attention_block.3} parent=5 // pred_region
      %s144 = ssub.s32 %s10, 1
      // Predicated region
      $region13: #{cross_attention_block.3} parent=11 // pred_check
        %p145 = pneg %p83
      $region14: #{cross_attention_block.3} parent=11 // pred_check_branch
        %147 = sbr.rel (%p145) target = $region16
      $region15: #{cross_attention_block.3} parent=11 // pred_region
        _
      $region16: #{cross_attention_block.3} parent=11 // pred_fallthru
        _
      // Predicated region
      $region17: #{cross_attention_block.3} parent=11 // pred_check
        %p148 = pneg %p104
      $region18: #{cross_attention_block.3} parent=11 // pred_check_branch
        %150 = sbr.rel (%p148) target = $region20
      $region19: #{cross_attention_block.3} parent=11 // pred_region
        _
      $region20: #{cross_attention_block.3} parent=11 // pred_fallthru
        _
    $region12: #{cross_attention_block.3} parent=5 // pred_fallthru
      _
    %p151 = scmp.lt.s32.totalorder %s10, 2
    // Predicated region
    $region21: #{cross_attention_block.3} parent=5 // pred_check
      %p152 = pneg %p151
    $region22: #{cross_attention_block.3} parent=5 // pred_check_branch
      %154 = sbr.rel (%p152) target = $region24
    $region23: #{cross_attention_block.3} parent=5 // pred_region
      // Predicated region
      $region25: #{cross_attention_block.3} parent=23 // pred_check
        %p155 = pneg %p30
      $region26: #{cross_attention_block.3} parent=23 // pred_check_branch
        %157 = sbr.rel (%p155) target = $region28
      $region27: #{cross_attention_block.3} parent=23 // pred_region
        %p158 = scmp.lt.s32.totalorder %s10, 1
        %s159 = scalar_select %p158, %s10, 1
        %s160 = smul.addr %s159, 8
        %s161 = smul.addr %s160, 8
        %s162 = scalar_lea.vmem %s0, %s161
      $region28: #{cross_attention_block.3} parent=23 // pred_fallthru
        _
      // Predicated region
      $region29: #{cross_attention_block.3} parent=23 // pred_check
        %p163 = pneg %p56
      $region30: #{cross_attention_block.3} parent=23 // pred_check_branch
        %165 = sbr.rel (%p163) target = $region32
      $region31: #{cross_attention_block.3} parent=23 // pred_region
        %p166 = scmp.lt.s32.totalorder %s10, 1
        %s167 = scalar_select %p166, %s10, 1
        %s168 = smul.addr %s167, 2
        %s169 = smul.addr %s168, 2
        %s170 = scalar_lea.vmem %s1, %s169
      $region32: #{cross_attention_block.3} parent=23 // pred_fallthru
        _
    $region24: #{cross_attention_block.3} parent=5 // pred_fallthru
      _
    %p171 = scmp.le.s32.totalorder 1, %s10
    %p172 = scmp.lt.s32.totalorder %s10, 3
    %p173 = pnand %p171, %p172
    %p174 = pneg %p173
    // Predicated region
    $region33: #{cross_attention_block.3} parent=5 // pred_check
      _
    $region34: #{cross_attention_block.3} parent=5 // pred_check_branch
      %176 = sbr.rel (%p173) target = $region36
    $region35: #{cross_attention_block.3} parent=5 // pred_region
      %s177 = ssub.s32 %s10, 1
      %p178 = scmp.lt.s32.totalorder %s15, 1
      %s179 = scalar_select %p178, %s15, 1
      %s180 = smul.addr %s179, 8
      %s181 = smul.addr %s180, 8
      %s182 = scalar_lea.vmem %s0, %s181
      %p183 = pneg %p36
      %p184 = pneg %p33
      %p185 = scmp.lt.s32.totalorder %s15, 1
      %s186 = scalar_select %p185, %s15, 1
      %s187 = smul.addr %s186, 2
      %s188 = smul.addr %s187, 2
      %s189 = scalar_lea.vmem %s1, %s188
      %p190 = pneg %p62
      %p191 = pneg %p59
      %p192 = pneg %p83
      %p193 = pneg %p80
      %p194 = pneg %p104
      %p195 = pneg %p101
      %p196 = pneg %p130
      %p197 = pneg %p127
      %p198 = scmp.lt.s32.totalorder %s15, 1
      %s199 = scalar_select %p198, %s15, 1
      %s200 = smul.addr %s199, 8
      %s201 = smul.addr %s200, 8
      %s202 = scalar_lea.vmem %s4, %s201
      %p203 = scmp.lt.s32.totalorder %s15, 1
      %s204 = scalar_select %p203, %s15, 1
      %s205 = smul.addr %s204, 8
      %s206 = smul.addr %s205, 8
      %s207 = scalar_lea.vmem %s0, %s206
      %p208 = scmp.lt.s32.totalorder %s15, 1
      %s209 = scalar_select %p208, %s15, 1
      %s210 = smul.addr %s209, 2
      %s211 = smul.addr %s210, 2
      %s212 = scalar_lea.vmem %s1, %s211
      %p213 = scmp.lt.s32.totalorder %s15, 1
      %s214 = scalar_select %p213, %s15, 1
      %s215 = smul.addr %s214, 8
      %s216 = smul.addr %s215, 8
      %s217 = scalar_lea.vmem %s4, %s216
      %v219 = vld [vmem:[%s207] sm:$0xff]
      %v220 = vld [vmem:[%s207 + $0x8] sm:$0xff]
      %v221 = vld [vmem:[%s207 + $0x10] sm:$0xff]
      %v222 = vld [vmem:[%s207 + $0x18] sm:$0xff]
      %v223 = vld [vmem:[%s207 + $0x20] sm:$0xff]
      %v224 = vld [vmem:[%s207 + $0x28] sm:$0xff]
      %v225 = vld [vmem:[%s207 + $0x30] sm:$0xff]
      %v226 = vld [vmem:[%s207 + $0x38] sm:$0xff]
      %v227 = vld [vmem:[%s212] sm:$0xf]
      %v228 = vld [vmem:[%s2] sm:$0xf]
      %v229 = vld [vmem:[%s2 + $0x4] sm:$0xf]
      %v230 = vld [vmem:[%s2 + $0x8] sm:$0xf]
      %v231 = vld [vmem:[%s2 + $0xc] sm:$0xf]
      %v232 = vld [vmem:[%s3] sm:$0xff]
      %v233 = vld [vmem:[%s3 + $0x8] sm:$0xff]
      %v234 = vld [vmem:[%s3 + $0x10] sm:$0xff]
      %v235 = vld [vmem:[%s3 + $0x18] sm:$0xff]
      %237 = vset.pattern.permute.xlu0 0
      %238 = vperm.xlu0 %237, %v232
      %v239 = vpop.permute.xlu0 %238
      %242 = vset.pattern.permute.xlu0 0
      %243 = vperm.xlu0 %242, %v233
      %v244 = vpop.permute.xlu0 %243
      %247 = vset.pattern.permute.xlu0 0
      %248 = vperm.xlu0 %247, %v234
      %v249 = vpop.permute.xlu0 %248
      %252 = vset.pattern.permute.xlu0 0
      %253 = vperm.xlu0 %252, %v235
      %v254 = vpop.permute.xlu0 %253
      %v260 = vunpack.c.l.b16 %v228
      %v261 = vunpack.c.l.b16 %v229
      %v262 = vunpack.c.l.b16 %v230
      %v263 = vunpack.c.l.b16 %v231
      %v264 = vpack.c.b16 %v261, %v260
      %v265 = vpack.c.b16 %v263, %v262
      %v268 = vunpack.c.l.s4 1983009808
      %v269 = vunpack.c.0.s8 %v268
      %v270 = vlaneseq
      %v271 = vshrl.u32 %v270, 7
      %v272 = vsub.s32 %v269, %v271
      %v273 = vrot.slane %v227, %v272
      %v274 = vcombine.high %v273, %v273
      %vm275 = vcmask 31744
      %v277 = vsel %vm275, %v264, 0
      %v280 = vsel %vm275, %v265, 0
      %vm282 = vcmask 1041408
      %v284 = vsel %vm282, %v273, 0
      %v287 = vsel %vm282, %v274, 0
      %289 = vmatprep.subr.bf16.mxu0 %v287
      %290 = vmatpush1.bf16.msra.mxu0 %v284
      %291 = vmatprep.subr.bf16.mxu0 0
      %292 = vmatpush1.bf16.msra.mxu0 0
      %293 = vmatprep.subr.bf16.mxu0 0
      %294 = vmatpush1.bf16.msra.mxu0 0
      %295 = vmatprep.subr.bf16.mxu0 0
      %296 = vmatpush1.bf16.msra.mxu0 0
      %297 = vmatprep.subr.bf16.mxu0 0
      %298 = vmatpush1.bf16.msra.mxu0 0
      %299 = vmatprep.subr.bf16.mxu0 0
      %300 = vmatpush1.bf16.msra.mxu0 0
      %301 = vmatprep.subr.bf16.mxu0 0
      %302 = vmatpush1.bf16.msra.mxu0 0
      %303 = vmatprep.subr.bf16.mxu0 0
      %304 = vmatpush1.bf16.msra.mxu0 0
      %305 = vmatprep.subr.bf16.mxu0 0
      %306 = vmatpush1.bf16.msra.mxu0 0
      %307 = vmatprep.subr.bf16.mxu0 0
      %308 = vmatpush1.bf16.msra.mxu0 0
      %309 = vmatprep.subr.bf16.mxu0 0
      %310 = vmatpush1.bf16.msra.mxu0 0
      %311 = vmatprep.subr.bf16.mxu0 0
      %312 = vmatpush1.bf16.msra.mxu0 0
      %313 = vmatprep.subr.bf16.mxu0 0
      %314 = vmatpush1.bf16.msra.mxu0 0
      %315 = vmatprep.subr.bf16.mxu0 0
      %316 = vmatpush1.bf16.msra.mxu0 0
      %317 = vmatprep.subr.bf16.mxu0 0
      %318 = vmatpush1.bf16.msra.mxu0 0
      %319 = vmatprep.subr.bf16.mxu0 0
      %320 = vmatpush1.bf16.msra.mxu0 0
      %321 = vmatprep.mubr.bf16.mxu0 0
      %322 = vmatmul.mubr.bf16.gmra.mrb[0].mxu0 %v277
      %v323 = vpop.f32.mrb[0].mxu0
      %v324 = vadd.f32 %v239, %v323
      %v325 = vpop.f32.mrb[0].mxu0
      %v326 = vadd.f32 %v239, %v325
      %v327 = vpop.f32.mrb[0].mxu0
      %v328 = vadd.f32 %v244, %v327
      %v329 = vpop.f32.mrb[0].mxu0
      %v330 = vadd.f32 %v244, %v329
      %331 = vmatprep.mubr.bf16.mxu0 0
      %332 = vmatmul.mubr.bf16.gmra.mrb[0].mxu0 %v280
      %v333 = vpop.f32.mrb[0].mxu0
      %v334 = vadd.f32 %v249, %v333
      %v335 = vpop.f32.mrb[0].mxu0
      %v336 = vadd.f32 %v249, %v335
      %v337 = vpop.f32.mrb[0].mxu0
      %v338 = vadd.f32 %v254, %v337
      %v339 = vpop.f32.mrb[0].mxu0
      %v340 = vadd.f32 %v254, %v339
      %341 = vdwg.mxu0
      %v342 = vadd.f32 %v219, %v220
      %343 = vadd.xlane.f32.xlu0 %v342
      %v344 = vpop.xlane.xlu0 %343
      %v345 = vadd.f32 %v221, %v222
      %346 = vadd.xlane.f32.xlu0 %v345
      %v347 = vpop.xlane.xlu0 %346
      %v348 = vadd.f32 %v223, %v224
      %349 = vadd.xlane.f32.xlu0 %v348
      %v350 = vpop.xlane.xlu0 %349
      %v351 = vadd.f32 %v225, %v226
      %352 = vadd.xlane.f32.xlu0 %v351
      %v353 = vpop.xlane.xlu0 %352
      %v354 = vmul.f32 %v219, %v219
      %v355 = vmul.f32 %v220, %v220
      %v356 = vmul.f32 %v221, %v221
      %v357 = vmul.f32 %v222, %v222
      %v358 = vmul.f32 %v223, %v223
      %v359 = vmul.f32 %v224, %v224
      %v360 = vmul.f32 %v225, %v225
      %v361 = vmul.f32 %v226, %v226
      %v362 = vadd.f32 %v354, %v355
      %363 = vadd.xlane.f32.xlu0 %v362
      %v364 = vpop.xlane.xlu0 %363
      %v365 = vadd.f32 %v356, %v357
      %366 = vadd.xlane.f32.xlu0 %v365
      %v367 = vpop.xlane.xlu0 %366
      %v368 = vadd.f32 %v358, %v359
      %369 = vadd.xlane.f32.xlu0 %v368
      %v370 = vpop.xlane.xlu0 %369
      %v371 = vadd.f32 %v360, %v361
      %372 = vadd.xlane.f32.xlu0 %v371
      %v373 = vpop.xlane.xlu0 %372
      %v374 = vadd.f32 %v324, %v326
      %375 = vadd.xlane.f32.xlu0 %v374
      %v376 = vpop.xlane.xlu0 %375
      %v377 = vadd.f32 %v328, %v330
      %378 = vadd.xlane.f32.xlu0 %v377
      %v379 = vpop.xlane.xlu0 %378
      %v380 = vadd.f32 %v334, %v336
      %381 = vadd.xlane.f32.xlu0 %v380
      %v382 = vpop.xlane.xlu0 %381
      %v383 = vadd.f32 %v338, %v340
      %384 = vadd.xlane.f32.xlu0 %v383
      %v385 = vpop.xlane.xlu0 %384
      %v386 = vmul.f32 %v324, %v324
      %v387 = vmul.f32 %v326, %v326
      %v388 = vmul.f32 %v328, %v328
      %v389 = vmul.f32 %v330, %v330
      %v390 = vmul.f32 %v334, %v334
      %v391 = vmul.f32 %v336, %v336
      %v392 = vmul.f32 %v338, %v338
      %v393 = vmul.f32 %v340, %v340
      %v394 = vadd.f32 %v386, %v387
      %395 = vadd.xlane.f32.xlu0 %v394
      %v396 = vpop.xlane.xlu0 %395
      %v397 = vadd.f32 %v388, %v389
      %398 = vadd.xlane.f32.xlu0 %v397
      %v399 = vpop.xlane.xlu0 %398
      %v400 = vadd.f32 %v390, %v391
      %401 = vadd.xlane.f32.xlu0 %v400
      %v402 = vpop.xlane.xlu0 %401
      %v403 = vadd.f32 %v392, %v393
      %404 = vadd.xlane.f32.xlu0 %v403
      %v405 = vpop.xlane.xlu0 %404
      %v406 = vmul.f32 %v344, 0.00390625
      %v407 = vmul.f32 %v347, 0.00390625
      %v408 = vmul.f32 %v350, 0.00390625
      %v409 = vmul.f32 %v353, 0.00390625
      %v410 = vmul.f32 %v376, 0.00390625
      %v411 = vmul.f32 %v379, 0.00390625
      %v412 = vmul.f32 %v382, 0.00390625
      %v413 = vmul.f32 %v385, 0.00390625
      %v414 = vmul.f32 %v344, %v406
      %v415 = vmul.f32 %v347, %v407
      %v416 = vmul.f32 %v350, %v408
      %v417 = vmul.f32 %v353, %v409
      %v418 = vsub.f32 %v364, %v414
      %v419 = vsub.f32 %v367, %v415
      %v420 = vsub.f32 %v370, %v416
      %v421 = vsub.f32 %v373, %v417
      %v422 = vmul.f32 %v418, 0.003921569
      %v423 = vmul.f32 %v419, 0.003921569
      %v424 = vmul.f32 %v420, 0.003921569
      %v425 = vmul.f32 %v421, 0.003921569
      %v426 = vmax.f32 %v422, 0.0
      %v427 = vmax.f32 %v423, 0.0
      %v428 = vmax.f32 %v424, 0.0
      %v429 = vmax.f32 %v425, 0.0
      %v430 = vmul.f32 %v376, %v410
      %v431 = vmul.f32 %v379, %v411
      %v432 = vmul.f32 %v382, %v412
      %v433 = vmul.f32 %v385, %v413
      %v434 = vsub.f32 %v396, %v430
      %v435 = vsub.f32 %v399, %v431
      %v436 = vsub.f32 %v402, %v432
      %v437 = vsub.f32 %v405, %v433
      %v438 = vmul.f32 %v434, 0.003921569
      %v439 = vmul.f32 %v435, 0.003921569
      %v440 = vmul.f32 %v436, 0.003921569
      %v441 = vmul.f32 %v437, 0.003921569
      %v442 = vmax.f32 %v438, 0.0
      %v443 = vmax.f32 %v439, 0.0
      %v444 = vmax.f32 %v440, 0.0
      %v445 = vmax.f32 %v441, 0.0
      %v446 = vadd.f32 %v426, 1e-05
      %v447 = vadd.f32 %v427, 1e-05
      %v448 = vadd.f32 %v428, 1e-05
      %v449 = vadd.f32 %v429, 1e-05
      %v450 = vrsqrt.pop %v446
      %v451 = vrsqrt.pop %v447
      %v452 = vrsqrt.pop %v448
      %v453 = vrsqrt.pop %v449
      %v454 = vadd.f32 %v442, 1e-05
      %v455 = vadd.f32 %v443, 1e-05
      %v456 = vadd.f32 %v444, 1e-05
      %v457 = vadd.f32 %v445, 1e-05
      %v458 = vrsqrt.pop %v454
      %v459 = vmul.f32 %v454, %v458
      %vm460 = vcmp.eq.f32.partialorder %v454, inf
      %v461 = vsel %vm460, %v454, %v459
      %vm462 = vcmp.eq.f32.partialorder %v454, 0.0
      %v463 = vand.u32 %v454, 2147483648
      %v464 = vsel %vm462, %v463, %v461
      %v465 = vrsqrt.pop %v455
      %v466 = vmul.f32 %v455, %v465
      %vm467 = vcmp.eq.f32.partialorder %v455, inf
      %v468 = vsel %vm467, %v455, %v466
      %vm469 = vcmp.eq.f32.partialorder %v455, 0.0
      %v470 = vand.u32 %v455, 2147483648
      %v471 = vsel %vm469, %v470, %v468
      %v472 = vrsqrt.pop %v456
      %v473 = vmul.f32 %v456, %v472
      %vm474 = vcmp.eq.f32.partialorder %v456, inf
      %v475 = vsel %vm474, %v456, %v473
      %vm476 = vcmp.eq.f32.partialorder %v456, 0.0
      %v477 = vand.u32 %v456, 2147483648
      %v478 = vsel %vm476, %v477, %v475
      %v479 = vrsqrt.pop %v457
      %v480 = vmul.f32 %v457, %v479
      %vm481 = vcmp.eq.f32.partialorder %v457, inf
      %v482 = vsel %vm481, %v457, %v480
      %vm483 = vcmp.eq.f32.partialorder %v457, 0.0
      %v484 = vand.u32 %v457, 2147483648
      %v485 = vsel %vm483, %v484, %v482
      %v486 = vmul.f32 %v450, %v464
      %v487 = vmul.f32 %v451, %v471
      %v488 = vmul.f32 %v452, %v478
      %v489 = vmul.f32 %v453, %v485
      %v490 = vsub.f32 %v219, %v406
      %v491 = vsub.f32 %v220, %v406
      %v492 = vsub.f32 %v221, %v407
      %v493 = vsub.f32 %v222, %v407
      %v494 = vsub.f32 %v223, %v408
      %v495 = vsub.f32 %v224, %v408
      %v496 = vsub.f32 %v225, %v409
      %v497 = vsub.f32 %v226, %v409
      %v498 = vmul.f32 %v490, %v486
      %v499 = vmul.f32 %v491, %v486
      %v500 = vmul.f32 %v492, %v487
      %v501 = vmul.f32 %v493, %v487
      %v502 = vmul.f32 %v494, %v488
      %v503 = vmul.f32 %v495, %v488
      %v504 = vmul.f32 %v496, %v489
      %v505 = vmul.f32 %v497, %v489
      %v506 = vadd.f32 %v498, %v410
      %v507 = vadd.f32 %v499, %v410
      %v508 = vadd.f32 %v500, %v411
      %v509 = vadd.f32 %v501, %v411
      %v510 = vadd.f32 %v502, %v412
      %v511 = vadd.f32 %v503, %v412
      %v512 = vadd.f32 %v504, %v413
      %v513 = vadd.f32 %v505, %v413
      %514 = vst [vmem:[%s217] sm:$0xff] %v506
      %515 = vst [vmem:[%s217 + $0x8] sm:$0xff] %v507
      %516 = vst [vmem:[%s217 + $0x10] sm:$0xff] %v508
      %517 = vst [vmem:[%s217 + $0x18] sm:$0xff] %v509
      %518 = vst [vmem:[%s217 + $0x20] sm:$0xff] %v510
      %519 = vst [vmem:[%s217 + $0x28] sm:$0xff] %v511
      %520 = vst [vmem:[%s217 + $0x30] sm:$0xff] %v512
      %521 = vst [vmem:[%s217 + $0x38] sm:$0xff] %v513
      %p522 = scmp.lt.s32.totalorder %s15, 1
      %s523 = scalar_select %p522, %s15, 1
      %s524 = smul.addr %s523, 8
      %s525 = smul.addr %s524, 8
      %s526 = scalar_lea.vmem %s4, %s525
      // Predicated region
      $region37: #{cross_attention_block.3} parent=35 // pred_check
        %p527 = pneg %p127
      $region38: #{cross_attention_block.3} parent=35 // pred_check_branch
        %529 = sbr.rel (%p527) target = $region40
      $region39: #{cross_attention_block.3} parent=35 // pred_region
        _
      $region40: #{cross_attention_block.3} parent=35 // pred_fallthru
        _
    $region36: #{cross_attention_block.3} parent=5 // pred_fallthru
      _
    %p530 = scmp.le.s32.totalorder 2, %s10
    // Predicated region
    $region41: #{cross_attention_block.3} parent=5 // pred_check
      %p531 = pneg %p530
    $region42: #{cross_attention_block.3} parent=5 // pred_check_branch
      %533 = sbr.rel (%p531) target = $region44
    $region43: #{cross_attention_block.3} parent=5 // pred_region
      %s534 = ssub.s32 %s10, 2
      // Predicated region
      $region45: #{cross_attention_block.3} parent=43 // pred_check
        %p535 = pneg %p133
      $region46: #{cross_attention_block.3} parent=43 // pred_check_branch
        %537 = sbr.rel (%p535) target = $region48
      $region47: #{cross_attention_block.3} parent=43 // pred_region
        %p538 = scmp.lt.s32.totalorder %s16, 1
        %s539 = scalar_select %p538, %s16, 1
        %s540 = smul.addr %s539, 8
        %s541 = smul.addr %s540, 8
        %s542 = scalar_lea.vmem %s4, %s541
      $region48: #{cross_attention_block.3} parent=43 // pred_fallthru
        _
    $region44: #{cross_attention_block.3} parent=5 // pred_fallthru
      _
  $region6: #{cross_attention_block.3} parent=0 // loop_footer
    %s14 = sadd.s32 1, %s10
  $region7: #{cross_attention_block.3} parent=0 // loop_footer_branch
    %9 = sbr.rel target = $region3
  $region8: #{cross_attention_block.3} parent=0 // loop_exit
    _

// kernel: cross_attention_block.2
$region0: #{cross_attention_block.2}
  #allocation0 [shape = 'u32[]', space=smem, size = 0x4, offset = 0x4, fixed_abs, tag = 'smem constant byte address 0x4 - core index']
  #allocation1 [shape = 'u32[144,128]{1,0:T(1,128)}', space=vmem, size = 0x12000, scoped, tag = 'internal scratch']
  %s0 = inlined_call_operand.vmem [shape: f32[2,32,256], index: 0, kind: input, shape index: {}]
  %s1 = inlined_call_operand.vmem [shape: f32[2,32,256], index: 1, kind: input, shape index: {}, may-alias: {1,2}]
  %s2 = inlined_call_operand.vmem [shape: f32[2,32,256], index: 2, kind: input, shape index: {}, may-alias: {1,2}]
  %s3 = inlined_call_operand.vmem [shape: bf16[5,32], index: 3, kind: input, shape index: {}]
  %s4 = inlined_call_operand.vmem [shape: f32[5,1], index: 4, kind: input, shape index: {}]
  %s5 = inlined_call_operand.vmem [shape: bf16[4,32], index: 5, kind: input, shape index: {}]
  %s6 = inlined_call_operand.vmem [shape: f32[4,1], index: 6, kind: input, shape index: {}]
  %s7 = inlined_call_operand.vmem [shape: bf16[4,32], index: 7, kind: input, shape index: {}]
  %s8 = inlined_call_operand.vmem [shape: f32[4,1], index: 8, kind: input, shape index: {}]
  %s9 = inlined_call_operand.vmem [shape: bf16[2,256,4], index: 9, kind: output, shape index: {}]
  %s10 = sld [smem:[#allocation0]]
  $region69: #{cross_attention_block.2} parent=0
    _
  %s12 = ssub.s32 1, %s10
  %s13 = scalar_select 0, %s12, %s10
  loop: start=0, step=1, limit=4
  $region2: #{cross_attention_block.2} parent=0 // loop_pre_header
    _
  $region3: #{cross_attention_block.2} parent=0 // loop_header
    %s15 = sphi 0, %s19
    %p16 = scmp.ge.s32.totalorder %s15, 4
    %s22 = sphi 0, %s34
    %s23 = sphi 0, %s30
    %s24 = sphi 0, %s22
    %s25 = sphi 0, %s23
    %s26 = sphi 0, %s24
    %s27 = sphi 0, %s25
    %s37 = sphi 0, %s39
    %s40 = sphi 0, %s37
    %s41 = sphi 0, %s40
    %s57 = sphi 0, %s41
    %s63 = sphi 0, %s65
    %s66 = sphi 0, %s63
    %s67 = sphi 0, %s66
    %s83 = sphi 0, %s67
    %s91 = sphi 0, %s93
    %s94 = sphi 0, %s91
    %s95 = sphi 0, %s94
    %s111 = sphi 0, %s95
    %s115 = sphi 0, %s115
    %s117 = sphi 0, %s115
    %s118 = sphi 0, %s117
    %s132 = sphi 0, %s118
    %s136 = sphi 0, %s136
    %s138 = sphi 0, %s136
    %s139 = sphi 0, %s138
    %s153 = sphi 0, %s139
    %s157 = sphi 0, %s157
    %s159 = sphi 0, %s157
    %s160 = sphi 0, %s159
    %s174 = sphi 0, %s160
    %s178 = sphi 0, %s178
    %s180 = sphi 0, %s178
    %s181 = sphi 0, %s180
    %s195 = sphi 0, %s181
    %s199 = sphi 0, %s199
    %s201 = sphi 0, %s199
    %s202 = sphi 0, %s201
    %s216 = sphi 0, %s202
    %s220 = sphi 0, %s220
    %s222 = sphi 0, %s220
    %s223 = sphi 0, %s222
    %s237 = sphi 0, %s223
    %s245 = sphi 0, %s247
    %s248 = sphi 0, %s245
    %s249 = sphi 0, %s248
    %s265 = sphi 0, %s249
  $region4: #{cross_attention_block.2} parent=0 // loop_header_branch
    %18 = sbr.rel (%p16) target = $region8
  $region5: #{cross_attention_block.2} parent=0 // loop_body
    %s20 = ssub.s32 %s15, 1
    %s21 = ssub.s32 %s15, 2
    %s28 = sadd.s32 1, %s23
    %p29 = scmp.ge.s32.totalorder %s28, 1
    %s30 = scalar_select %p29, 0, %s28
    %s31 = sadd.s32 1, %s22
    %s32 = scalar_select %p29, %s31, %s22
    %p33 = scmp.ge.s32.totalorder %s32, 2
    %s34 = scalar_select %p33, 0, %s32
    %s35 = ssub.s32 %s22, %s34
    %p36 = scmp.eq.s32.totalorder %s35, 0
    %s38 = sadd.s32 %s37, 1
    %s39 = scalar_select %p36, %s37, %s38
    %p42 = pneg %p36
    %p43 = scmp.eq.s32.totalorder %s15, 1
    %p44 = por %p42, %p43
    %p45 = scmp.ne.s32.totalorder %s37, %s40
    %p46 = scmp.eq.s32.totalorder %s15, 0
    %p47 = por %p45, %p46
    %p48 = scmp.ne.s32.totalorder %s37, %s40
    %p49 = scmp.eq.s32.totalorder %s20, 1
    %p50 = por %p48, %p49
    %p51 = scmp.ne.s32.totalorder %s40, %s41
    %p52 = scmp.eq.s32.totalorder %s20, 0
    %p53 = por %p51, %p52
    %p54 = scmp.ne.s32.totalorder %s40, %s41
    %p55 = scmp.eq.s32.totalorder %s21, 1
    %p56 = por %p54, %p55
    %p58 = scmp.ne.s32.totalorder %s41, %s57
    %p59 = scmp.eq.s32.totalorder %s21, 0
    %p60 = por %p58, %p59
    %s61 = ssub.s32 %s22, %s34
    %p62 = scmp.eq.s32.totalorder %s61, 0
    %s64 = sadd.s32 %s63, 1
    %s65 = scalar_select %p62, %s63, %s64
    %p68 = pneg %p62
    %p69 = scmp.eq.s32.totalorder %s15, 1
    %p70 = por %p68, %p69
    %p71 = scmp.ne.s32.totalorder %s63, %s66
    %p72 = scmp.eq.s32.totalorder %s15, 0
    %p73 = por %p71, %p72
    %p74 = scmp.ne.s32.totalorder %s63, %s66
    %p75 = scmp.eq.s32.totalorder %s20, 1
    %p76 = por %p74, %p75
    %p77 = scmp.ne.s32.totalorder %s66, %s67
    %p78 = scmp.eq.s32.totalorder %s20, 0
    %p79 = por %p77, %p78
    %p80 = scmp.ne.s32.totalorder %s66, %s67
    %p81 = scmp.eq.s32.totalorder %s21, 1
    %p82 = por %p80, %p81
    %p84 = scmp.ne.s32.totalorder %s67, %s83
    %p85 = scmp.eq.s32.totalorder %s21, 0
    %p86 = por %p84, %p85
    %s87 = ssub.s32 %s22, %s34
    %s88 = ssub.s32 %s23, %s30
    %s89 = sor.u32 %s87, %s88
    %p90 = scmp.eq.s32.totalorder %s89, 0
    %s92 = sadd.s32 %s91, 1
    %s93 = scalar_select %p90, %s91, %s92
    %p96 = pneg %p90
    %p97 = scmp.eq.s32.totalorder %s15, 1
    %p98 = por %p96, %p97
    %p99 = scmp.ne.s32.totalorder %s91, %s94
    %p100 = scmp.eq.s32.totalorder %s15, 0
    %p101 = por %p99, %p100
    %p102 = scmp.ne.s32.totalorder %s91, %s94
    %p103 = scmp.eq.s32.totalorder %s20, 1
    %p104 = por %p102, %p103
    %p105 = scmp.ne.s32.totalorder %s94, %s95
    %p106 = scmp.eq.s32.totalorder %s20, 0
    %p107 = por %p105, %p106
    %p108 = scmp.ne.s32.totalorder %s94, %s95
    %p109 = scmp.eq.s32.totalorder %s21, 1
    %p110 = por %p108, %p109
    %p112 = scmp.ne.s32.totalorder %s95, %s111
    %p113 = scmp.eq.s32.totalorder %s21, 0
    %p114 = por %p112, %p113
    %s116 = sadd.s32 %s115, 1
    %p119 = scmp.eq.s32.totalorder %s15, 1
    %p120 = scmp.ne.s32.totalorder %s115, %s117
    %p121 = scmp.eq.s32.totalorder %s15, 0
    %p122 = por %p120, %p121
    %p123 = scmp.ne.s32.totalorder %s115, %s117
    %p124 = scmp.eq.s32.totalorder %s20, 1
    %p125 = por %p123, %p124
    %p126 = scmp.ne.s32.totalorder %s117, %s118
    %p127 = scmp.eq.s32.totalorder %s20, 0
    %p128 = por %p126, %p127
    %p129 = scmp.ne.s32.totalorder %s117, %s118
    %p130 = scmp.eq.s32.totalorder %s21, 1
    %p131 = por %p129, %p130
    %p133 = scmp.ne.s32.totalorder %s118, %s132
    %p134 = scmp.eq.s32.totalorder %s21, 0
    %p135 = por %p133, %p134
    %s137 = sadd.s32 %s136, 1
    %p140 = scmp.eq.s32.totalorder %s15, 1
    %p141 = scmp.ne.s32.totalorder %s136, %s138
    %p142 = scmp.eq.s32.totalorder %s15, 0
    %p143 = por %p141, %p142
    %p144 = scmp.ne.s32.totalorder %s136, %s138
    %p145 = scmp.eq.s32.totalorder %s20, 1
    %p146 = por %p144, %p145
    %p147 = scmp.ne.s32.totalorder %s138, %s139
    %p148 = scmp.eq.s32.totalorder %s20, 0
    %p149 = por %p147, %p148
    %p150 = scmp.ne.s32.totalorder %s138, %s139
    %p151 = scmp.eq.s32.totalorder %s21, 1
    %p152 = por %p150, %p151
    %p154 = scmp.ne.s32.totalorder %s139, %s153
    %p155 = scmp.eq.s32.totalorder %s21, 0
    %p156 = por %p154, %p155
    %s158 = sadd.s32 %s157, 1
    %p161 = scmp.eq.s32.totalorder %s15, 1
    %p162 = scmp.ne.s32.totalorder %s157, %s159
    %p163 = scmp.eq.s32.totalorder %s15, 0
    %p164 = por %p162, %p163
    %p165 = scmp.ne.s32.totalorder %s157, %s159
    %p166 = scmp.eq.s32.totalorder %s20, 1
    %p167 = por %p165, %p166
    %p168 = scmp.ne.s32.totalorder %s159, %s160
    %p169 = scmp.eq.s32.totalorder %s20, 0
    %p170 = por %p168, %p169
    %p171 = scmp.ne.s32.totalorder %s159, %s160
    %p172 = scmp.eq.s32.totalorder %s21, 1
    %p173 = por %p171, %p172
    %p175 = scmp.ne.s32.totalorder %s160, %s174
    %p176 = scmp.eq.s32.totalorder %s21, 0
    %p177 = por %p175, %p176
    %s179 = sadd.s32 %s178, 1
    %p182 = scmp.eq.s32.totalorder %s15, 1
    %p183 = scmp.ne.s32.totalorder %s178, %s180
    %p184 = scmp.eq.s32.totalorder %s15, 0
    %p185 = por %p183, %p184
    %p186 = scmp.ne.s32.totalorder %s178, %s180
    %p187 = scmp.eq.s32.totalorder %s20, 1
    %p188 = por %p186, %p187
    %p189 = scmp.ne.s32.totalorder %s180, %s181
    %p190 = scmp.eq.s32.totalorder %s20, 0
    %p191 = por %p189, %p190
    %p192 = scmp.ne.s32.totalorder %s180, %s181
    %p193 = scmp.eq.s32.totalorder %s21, 1
    %p194 = por %p192, %p193
    %p196 = scmp.ne.s32.totalorder %s181, %s195
    %p197 = scmp.eq.s32.totalorder %s21, 0
    %p198 = por %p196, %p197
    %s200 = sadd.s32 %s199, 1
    %p203 = scmp.eq.s32.totalorder %s15, 1
    %p204 = scmp.ne.s32.totalorder %s199, %s201
    %p205 = scmp.eq.s32.totalorder %s15, 0
    %p206 = por %p204, %p205
    %p207 = scmp.ne.s32.totalorder %s199, %s201
    %p208 = scmp.eq.s32.totalorder %s20, 1
    %p209 = por %p207, %p208
    %p210 = scmp.ne.s32.totalorder %s201, %s202
    %p211 = scmp.eq.s32.totalorder %s20, 0
    %p212 = por %p210, %p211
    %p213 = scmp.ne.s32.totalorder %s201, %s202
    %p214 = scmp.eq.s32.totalorder %s21, 1
    %p215 = por %p213, %p214
    %p217 = scmp.ne.s32.totalorder %s202, %s216
    %p218 = scmp.eq.s32.totalorder %s21, 0
    %p219 = por %p217, %p218
    %s221 = sadd.s32 %s220, 1
    %p224 = scmp.eq.s32.totalorder %s15, 1
    %p225 = scmp.ne.s32.totalorder %s220, %s222
    %p226 = scmp.eq.s32.totalorder %s15, 0
    %p227 = por %p225, %p226
    %p228 = scmp.ne.s32.totalorder %s220, %s222
    %p229 = scmp.eq.s32.totalorder %s20, 1
    %p230 = por %p228, %p229
    %p231 = scmp.ne.s32.totalorder %s222, %s223
    %p232 = scmp.eq.s32.totalorder %s20, 0
    %p233 = por %p231, %p232
    %p234 = scmp.ne.s32.totalorder %s222, %s223
    %p235 = scmp.eq.s32.totalorder %s21, 1
    %p236 = por %p234, %p235
    %p238 = scmp.ne.s32.totalorder %s223, %s237
    %p239 = scmp.eq.s32.totalorder %s21, 0
    %p240 = por %p238, %p239
    %s241 = ssub.s32 %s22, %s34
    %s242 = ssub.s32 %s23, %s30
    %s243 = sor.u32 %s241, %s242
    %p244 = scmp.eq.s32.totalorder %s243, 0
    %s246 = sadd.s32 %s245, 1
    %s247 = scalar_select %p244, %s245, %s246
    %p250 = pneg %p244
    %p251 = scmp.eq.s32.totalorder %s15, 1
    %p252 = por %p250, %p251
    %p253 = scmp.ne.s32.totalorder %s245, %s248
    %p254 = scmp.eq.s32.totalorder %s15, 0
    %p255 = por %p253, %p254
    %p256 = scmp.ne.s32.totalorder %s245, %s248
    %p257 = scmp.eq.s32.totalorder %s20, 1
    %p258 = por %p256, %p257
    %p259 = scmp.ne.s32.totalorder %s248, %s249
    %p260 = scmp.eq.s32.totalorder %s20, 0
    %p261 = por %p259, %p260
    %p262 = scmp.ne.s32.totalorder %s248, %s249
    %p263 = scmp.eq.s32.totalorder %s21, 1
    %p264 = por %p262, %p263
    %p266 = scmp.ne.s32.totalorder %s249, %s265
    %p267 = scmp.eq.s32.totalorder %s21, 0
    %p268 = por %p266, %p267
    %p269 = scmp.le.s32.totalorder 1, %s15
    %p270 = scmp.lt.s32.totalorder %s15, 3
    %p271 = pnand %p269, %p270
    %p272 = pneg %p271
    // Predicated region
    $region9: #{cross_attention_block.2} parent=5 // pred_check
      _
    $region10: #{cross_attention_block.2} parent=5 // pred_check_branch
      %274 = sbr.rel (%p271) target = $region12
    $region11: #{cross_attention_block.2} parent=5 // pred_region
      %s275 = ssub.s32 %s15, 1
      // Predicated region
      $region13: #{cross_attention_block.2} parent=11 // pred_check
        %p276 = pneg %p128
      $region14: #{cross_attention_block.2} parent=11 // pred_check_branch
        %278 = sbr.rel (%p276) target = $region16
      $region15: #{cross_attention_block.2} parent=11 // pred_region
        _
      $region16: #{cross_attention_block.2} parent=11 // pred_fallthru
        _
      // Predicated region
      $region17: #{cross_attention_block.2} parent=11 // pred_check
        %p279 = pneg %p149
      $region18: #{cross_attention_block.2} parent=11 // pred_check_branch
        %281 = sbr.rel (%p279) target = $region20
      $region19: #{cross_attention_block.2} parent=11 // pred_region
        _
      $region20: #{cross_attention_block.2} parent=11 // pred_fallthru
        _
      // Predicated region
      $region21: #{cross_attention_block.2} parent=11 // pred_check
        %p282 = pneg %p170
      $region22: #{cross_attention_block.2} parent=11 // pred_check_branch
        %284 = sbr.rel (%p282) target = $region24
      $region23: #{cross_attention_block.2} parent=11 // pred_region
        _
      $region24: #{cross_attention_block.2} parent=11 // pred_fallthru
        _
      // Predicated region
      $region25: #{cross_attention_block.2} parent=11 // pred_check
        %p285 = pneg %p191
      $region26: #{cross_attention_block.2} parent=11 // pred_check_branch
        %287 = sbr.rel (%p285) target = $region28
      $region27: #{cross_attention_block.2} parent=11 // pred_region
        _
      $region28: #{cross_attention_block.2} parent=11 // pred_fallthru
        _
      // Predicated region
      $region29: #{cross_attention_block.2} parent=11 // pred_check
        %p288 = pneg %p212
      $region30: #{cross_attention_block.2} parent=11 // pred_check_branch
        %290 = sbr.rel (%p288) target = $region32
      $region31: #{cross_attention_block.2} parent=11 // pred_region
        _
      $region32: #{cross_attention_block.2} parent=11 // pred_fallthru
        _
      // Predicated region
      $region33: #{cross_attention_block.2} parent=11 // pred_check
        %p291 = pneg %p233
      $region34: #{cross_attention_block.2} parent=11 // pred_check_branch
        %293 = sbr.rel (%p291) target = $region36
      $region35: #{cross_attention_block.2} parent=11 // pred_region
        _
      $region36: #{cross_attention_block.2} parent=11 // pred_fallthru
        _
    $region12: #{cross_attention_block.2} parent=5 // pred_fallthru
      _
    %p294 = scmp.lt.s32.totalorder %s15, 2
    // Predicated region
    $region37: #{cross_attention_block.2} parent=5 // pred_check
      %p295 = pneg %p294
    $region38: #{cross_attention_block.2} parent=5 // pred_check_branch
      %297 = sbr.rel (%p295) target = $region40
    $region39: #{cross_attention_block.2} parent=5 // pred_region
      // Predicated region
      $region41: #{cross_attention_block.2} parent=39 // pred_check
        %p298 = pneg %p47
      $region42: #{cross_attention_block.2} parent=39 // pred_check_branch
        %300 = sbr.rel (%p298) target = $region44
      $region43: #{cross_attention_block.2} parent=39 // pred_region
        %p301 = scmp.lt.s32.totalorder %s22, 1
        %s302 = scalar_select %p301, %s22, 1
        %s303 = smul.addr %s302, 8
        %s304 = smul.addr %s303, 8
        %s305 = scalar_lea.vmem %s0, %s304
      $region44: #{cross_attention_block.2} parent=39 // pred_fallthru
        _
      // Predicated region
      $region45: #{cross_attention_block.2} parent=39 // pred_check
        %p306 = pneg %p73
      $region46: #{cross_attention_block.2} parent=39 // pred_check_branch
        %308 = sbr.rel (%p306) target = $region48
      $region47: #{cross_attention_block.2} parent=39 // pred_region
        %p309 = scmp.lt.s32.totalorder %s22, 1
        %s310 = scalar_select %p309, %s22, 1
        %s311 = smul.addr %s310, 8
        %s312 = smul.addr %s311, 8
        %s313 = scalar_lea.vmem %s1, %s312
      $region48: #{cross_attention_block.2} parent=39 // pred_fallthru
        _
      // Predicated region
      $region49: #{cross_attention_block.2} parent=39 // pred_check
        %p314 = pneg %p101
      $region50: #{cross_attention_block.2} parent=39 // pred_check_branch
        %316 = sbr.rel (%p314) target = $region52
      $region51: #{cross_attention_block.2} parent=39 // pred_region
        %s317 = smul.u32 2, %s23
        %p318 = scmp.lt.s32.totalorder %s22, 1
        %s319 = scalar_select %p318, %s22, 1
        %p320 = scmp.lt.s32.totalorder %s317, 1
        %s321 = scalar_select %p320, %s317, 1
        %s322 = smul.addr %s319, 8
        %s323 = sadd.s32 %s321, %s322
        %s324 = smul.addr %s323, 8
        %s325 = scalar_lea.vmem %s2, %s324
        %s326 = smul.u32 2, %s23
      $region52: #{cross_attention_block.2} parent=39 // pred_fallthru
        _
    $region40: #{cross_attention_block.2} parent=5 // pred_fallthru
      _
    %p327 = scmp.le.s32.totalorder 1, %s15
    %p328 = scmp.lt.s32.totalorder %s15, 3
    %p329 = pnand %p327, %p328
    %p330 = pneg %p329
    // Predicated region
    $region53: #{cross_attention_block.2} parent=5 // pred_check
      _
    $region54: #{cross_attention_block.2} parent=5 // pred_check_branch
      %332 = sbr.rel (%p329) target = $region56
    $region55: #{cross_attention_block.2} parent=5 // pred_region
      %s333 = ssub.s32 %s15, 1
      %p334 = scmp.lt.s32.totalorder %s24, 1
      %s335 = scalar_select %p334, %s24, 1
      %s336 = smul.addr %s335, 8
      %s337 = smul.addr %s336, 8
      %s338 = scalar_lea.vmem %s0, %s337
      %p339 = pneg %p53
      %p340 = pneg %p50
      %p341 = scmp.lt.s32.totalorder %s24, 1
      %s342 = scalar_select %p341, %s24, 1
      %s343 = smul.addr %s342, 8
      %s344 = smul.addr %s343, 8
      %s345 = scalar_lea.vmem %s1, %s344
      %p346 = pneg %p79
      %p347 = pneg %p76
      %s348 = smul.u32 2, %s25
      %p349 = scmp.lt.s32.totalorder %s24, 1
      %s350 = scalar_select %p349, %s24, 1
      %p351 = scmp.lt.s32.totalorder %s348, 1
      %s352 = scalar_select %p351, %s348, 1
      %s353 = smul.addr %s350, 8
      %s354 = sadd.s32 %s352, %s353
      %s355 = smul.addr %s354, 8
      %s356 = scalar_lea.vmem %s2, %s355
      %p357 = pneg %p107
      %p358 = pneg %p104
      %p359 = pneg %p128
      %p360 = pneg %p125
      %p361 = pneg %p149
      %p362 = pneg %p146
      %p363 = pneg %p170
      %p364 = pneg %p167
      %p365 = pneg %p191
      %p366 = pneg %p188
      %p367 = pneg %p212
      %p368 = pneg %p209
      %p369 = pneg %p233
      %p370 = pneg %p230
      %p371 = pneg %p261
      %p372 = pneg %p258
      %s373 = smul.u32 32, %s25
      %p374 = scmp.lt.s32.totalorder %s24, 1
      %s375 = scalar_select %p374, %s24, 1
      %p376 = scmp.lt.s32.totalorder %s373, 31
      %s377 = scalar_select %p376, %s373, 31
      %s378 = smul.addr %s375, 32
      %s379 = sadd.s32 %s377, %s378
      %s380 = smul.addr %s379, 4
      %s381 = scalar_lea.vmem %s9, %s380
      %p382 = scmp.lt.s32.totalorder %s24, 1
      %s383 = scalar_select %p382, %s24, 1
      %s384 = smul.addr %s383, 8
      %s385 = smul.addr %s384, 8
      %s386 = scalar_lea.vmem %s0, %s385
      %p387 = scmp.lt.s32.totalorder %s24, 1
      %s388 = scalar_select %p387, %s24, 1
      %s389 = smul.addr %s388, 8
      %s390 = smul.addr %s389, 8
      %s391 = scalar_lea.vmem %s1, %s390
      %s392 = smul.u32 2, %s25
      %p393 = scmp.lt.s32.totalorder %s24, 1
      %s394 = scalar_select %p393, %s24, 1
      %p395 = scmp.lt.s32.totalorder %s392, 1
      %s396 = scalar_select %p395, %s392, 1
      %s397 = smul.addr %s394, 8
      %s398 = sadd.s32 %s396, %s397
      %s399 = smul.addr %s398, 8
      %s400 = scalar_lea.vmem %s2, %s399
      %s401 = smul.u32 2, %s25
      %s402 = smul.u32 32, %s25
      %p403 = scmp.lt.s32.totalorder %s24, 1
      %s404 = scalar_select %p403, %s24, 1
      %p405 = scmp.lt.s32.totalorder %s402, 31
      %s406 = scalar_select %p405, %s402, 31
      %s407 = smul.addr %s404, 32
      %s408 = sadd.s32 %s406, %s407
      %s409 = smul.addr %s408, 4
      %s410 = scalar_lea.vmem %s9, %s409
      %s411 = smul.u32 32, %s25
      %v413 = vld [vmem:[%s386] sm:$0xff]
      %v414 = vld [vmem:[%s386 + $0x8] sm:$0xff]
      %v415 = vld [vmem:[%s386 + $0x10] sm:$0xff]
      %v416 = vld [vmem:[%s386 + $0x18] sm:$0xff]
      %v417 = vld [vmem:[%s386 + $0x20] sm:$0xff]
      %v418 = vld [vmem:[%s386 + $0x28] sm:$0xff]
      %v419 = vld [vmem:[%s386 + $0x30] sm:$0xff]
      %v420 = vld [vmem:[%s386 + $0x38] sm:$0xff]
      %v421 = vpack.c.bf16 %v415, %v413
      %v422 = vpack.c.bf16 %v416, %v414
      %v423 = vpack.c.bf16 %v419, %v417
      %v424 = vpack.c.bf16 %v420, %v418
      %v425 = vld [vmem:[%s391] sm:$0xff]
      %v426 = vld [vmem:[%s391 + $0x8] sm:$0xff]
      %v427 = vld [vmem:[%s391 + $0x10] sm:$0xff]
      %v428 = vld [vmem:[%s391 + $0x18] sm:$0xff]
      %v429 = vld [vmem:[%s391 + $0x20] sm:$0xff]
      %v430 = vld [vmem:[%s391 + $0x28] sm:$0xff]
      %v431 = vld [vmem:[%s391 + $0x30] sm:$0xff]
      %v432 = vld [vmem:[%s391 + $0x38] sm:$0xff]
      %v433 = vpack.c.bf16 %v427, %v425
      %v434 = vpack.c.bf16 %v428, %v426
      %v435 = vpack.c.bf16 %v431, %v429
      %v436 = vpack.c.bf16 %v432, %v430
      %v437 = vld [vmem:[%s400] sm:$0xff]
      %v438 = vld [vmem:[%s400 + $0x8] sm:$0xff]
      %v439 = vld [vmem:[%s400 + $0x10] sm:$0xff]
      %v440 = vld [vmem:[%s400 + $0x18] sm:$0xff]
      %v441 = vld [vmem:[%s400 + $0x20] sm:$0xff]
      %v442 = vld [vmem:[%s400 + $0x28] sm:$0xff]
      %v443 = vld [vmem:[%s400 + $0x30] sm:$0xff]
      %v444 = vld [vmem:[%s400 + $0x38] sm:$0xff]
      %v445 = vpack.c.bf16 %v439, %v437
      %v446 = vpack.c.bf16 %v440, %v438
      %v447 = vpack.c.bf16 %v443, %v441
      %v448 = vpack.c.bf16 %v444, %v442
      %v449 = vld [vmem:[%s3] sm:$0x7]
      %v450 = vld [vmem:[%s4] sm:$0x1f]
      %452 = vset.pattern.permute.xlu0 0
      %453 = vperm.xlu0 %452, %v450
      %v454 = vpop.permute.xlu0 %453
      %vm456 = vcmask 261120
      %v458 = vsel %vm456, %v449, 0
      %460 = vmatprep.subr.bf16.mxu0 %v422
      %461 = vmatpush1.bf16.msra.mxu0 %v421
      %462 = vmatprep.subr.bf16.mxu0 %v424
      %463 = vmatpush1.bf16.msra.mxu0 %v423
      %464 = vmatprep.subr.bf16.mxu0 0
      %465 = vmatpush1.bf16.msra.mxu0 0
      %466 = vmatprep.subr.bf16.mxu0 0
      %467 = vmatpush1.bf16.msra.mxu0 0
      %468 = vmatprep.subr.bf16.mxu0 0
      %469 = vmatpush1.bf16.msra.mxu0 0
      %470 = vmatprep.subr.bf16.mxu0 0
      %471 = vmatpush1.bf16.msra.mxu0 0
      %472 = vmatprep.subr.bf16.mxu0 0
      %473 = vmatpush1.bf16.msra.mxu0 0
      %474 = vmatprep.subr.bf16.mxu0 0
      %475 = vmatpush1.bf16.msra.mxu0 0
      %476 = vmatprep.subr.bf16.mxu0 0
      %477 = vmatpush1.bf16.msra.mxu0 0
      %478 = vmatprep.subr.bf16.mxu0 0
      %479 = vmatpush1.bf16.msra.mxu0 0
      %480 = vmatprep.subr.bf16.mxu0 0
      %481 = vmatpush1.bf16.msra.mxu0 0
      %482 = vmatprep.subr.bf16.mxu0 0
      %483 = vmatpush1.bf16.msra.mxu0 0
      %484 = vmatprep.subr.bf16.mxu0 0
      %485 = vmatpush1.bf16.msra.mxu0 0
      %486 = vmatprep.subr.bf16.mxu0 0
      %487 = vmatpush1.bf16.msra.mxu0 0
      %488 = vmatprep.subr.bf16.mxu0 0
      %489 = vmatpush1.bf16.msra.mxu0 0
      %490 = vmatprep.subr.bf16.mxu0 0
      %491 = vmatpush1.bf16.msra.mxu0 0
      %492 = vmatprep.mubr.bf16.mxu0 0
      %493 = vmatmul.mubr.bf16.gmra.mrb[0].mxu0 %v458
      %v494 = vpop.f32.mrb[0].mxu0
      %v495 = vadd.f32 %v454, %v494
      %v496 = vpop.f32.mrb[0].mxu0
      %v497 = vadd.f32 %v454, %v496
      %v498 = vpop.f32.mrb[0].mxu0
      %v499 = vpop.f32.mrb[0].mxu0
      %500 = vdwg.mxu0
      %v501 = vpack.c.bf16 %v495, %v495
      %v502 = vpack.c.bf16 %v497, %v497
      %v503 = vld [vmem:[%s5] sm:$0x3]
      %v504 = vld [vmem:[%s6] sm:$0xf]
      %506 = vset.pattern.permute.xlu0 0
      %507 = vperm.xlu0 %506, %v504
      %v508 = vpop.permute.xlu0 %507
      %v511 = vsel %vm456, %v503, 0
      %513 = vmatprep.subr.bf16.mxu0 %v434
      %514 = vmatpush1.bf16.msra.mxu0 %v433
      %515 = vmatprep.subr.bf16.mxu0 %v436
      %516 = vmatpush1.bf16.msra.mxu0 %v435
      %517 = vmatprep.subr.bf16.mxu0 0
      %518 = vmatpush1.bf16.msra.mxu0 0
      %519 = vmatprep.subr.bf16.mxu0 0
      %520 = vmatpush1.bf16.msra.mxu0 0
      %521 = vmatprep.subr.bf16.mxu0 0
      %522 = vmatpush1.bf16.msra.mxu0 0
      %523 = vmatprep.subr.bf16.mxu0 0
      %524 = vmatpush1.bf16.msra.mxu0 0
      %525 = vmatprep.subr.bf16.mxu0 0
      %526 = vmatpush1.bf16.msra.mxu0 0
      %527 = vmatprep.subr.bf16.mxu0 0
      %528 = vmatpush1.bf16.msra.mxu0 0
      %529 = vmatprep.subr.bf16.mxu0 0
      %530 = vmatpush1.bf16.msra.mxu0 0
      %531 = vmatprep.subr.bf16.mxu0 0
      %532 = vmatpush1.bf16.msra.mxu0 0
      %533 = vmatprep.subr.bf16.mxu0 0
      %534 = vmatpush1.bf16.msra.mxu0 0
      %535 = vmatprep.subr.bf16.mxu0 0
      %536 = vmatpush1.bf16.msra.mxu0 0
      %537 = vmatprep.subr.bf16.mxu0 0
      %538 = vmatpush1.bf16.msra.mxu0 0
      %539 = vmatprep.subr.bf16.mxu0 0
      %540 = vmatpush1.bf16.msra.mxu0 0
      %541 = vmatprep.subr.bf16.mxu0 0
      %542 = vmatpush1.bf16.msra.mxu0 0
      %543 = vmatprep.subr.bf16.mxu0 0
      %544 = vmatpush1.bf16.msra.mxu0 0
      %545 = vmatprep.mubr.bf16.mxu0 0
      %546 = vmatmul.mubr.bf16.gmra.mrb[0].mxu0 %v511
      %v547 = vpop.f32.mrb[0].mxu0
      %v548 = vadd.f32 %v508, %v547
      %v549 = vpop.f32.mrb[0].mxu0
      %v550 = vadd.f32 %v508, %v549
      %v551 = vpop.f32.mrb[0].mxu0
      %v552 = vpop.f32.mrb[0].mxu0
      %553 = vdwg.mxu0
      %v554 = vpack.c.bf16 %v548, %v548
      %v555 = vpack.c.bf16 %v550, %v550
      %v556 = vld [vmem:[%s7] sm:$0x3]
      %v557 = vld [vmem:[%s8] sm:$0xf]
      %559 = vset.pattern.permute.xlu0 0
      %560 = vperm.xlu0 %559, %v557
      %v561 = vpop.permute.xlu0 %560
      %v564 = vsel %vm456, %v556, 0
      %566 = vmatprep.subr.bf16.mxu0 %v446
      %567 = vmatpush1.bf16.msra.mxu0 %v445
      %568 = vmatprep.subr.bf16.mxu0 %v448
      %569 = vmatpush1.bf16.msra.mxu0 %v447
      %570 = vmatprep.subr.bf16.mxu0 0
      %571 = vmatpush1.bf16.msra.mxu0 0
      %572 = vmatprep.subr.bf16.mxu0 0
      %573 = vmatpush1.bf16.msra.mxu0 0
      %574 = vmatprep.subr.bf16.mxu0 0
      %575 = vmatpush1.bf16.msra.mxu0 0
      %576 = vmatprep.subr.bf16.mxu0 0
      %577 = vmatpush1.bf16.msra.mxu0 0
      %578 = vmatprep.subr.bf16.mxu0 0
      %579 = vmatpush1.bf16.msra.mxu0 0
      %580 = vmatprep.subr.bf16.mxu0 0
      %581 = vmatpush1.bf16.msra.mxu0 0
      %582 = vmatprep.subr.bf16.mxu0 0
      %583 = vmatpush1.bf16.msra.mxu0 0
      %584 = vmatprep.subr.bf16.mxu0 0
      %585 = vmatpush1.bf16.msra.mxu0 0
      %586 = vmatprep.subr.bf16.mxu0 0
      %587 = vmatpush1.bf16.msra.mxu0 0
      %588 = vmatprep.subr.bf16.mxu0 0
      %589 = vmatpush1.bf16.msra.mxu0 0
      %590 = vmatprep.subr.bf16.mxu0 0
      %591 = vmatpush1.bf16.msra.mxu0 0
      %592 = vmatprep.subr.bf16.mxu0 0
      %593 = vmatpush1.bf16.msra.mxu0 0
      %594 = vmatprep.subr.bf16.mxu0 0
      %595 = vmatpush1.bf16.msra.mxu0 0
      %596 = vmatprep.subr.bf16.mxu0 0
      %597 = vmatpush1.bf16.msra.mxu0 0
      %598 = vmatprep.mubr.bf16.mxu0 0
      %599 = vmatmul.mubr.bf16.gmra.mrb[0].mxu0 %v564
      %v600 = vpop.f32.mrb[0].mxu0
      %v601 = vadd.f32 %v561, %v600
      %v602 = vpop.f32.mrb[0].mxu0
      %v603 = vadd.f32 %v561, %v602
      %v604 = vpop.f32.mrb[0].mxu0
      %v605 = vpop.f32.mrb[0].mxu0
      %606 = vdwg.mxu0
      %v607 = vpack.c.bf16 %v601, %v601
      %v608 = vpack.c.bf16 %v603, %v603
      %609 = vxpose.xlu0.c.b16.start [1/8] %v607, 128
      %610 = vxpose.xlu0.c.b16.cont [2/8] 0, 128
      %611 = vxpose.xlu0.c.b16.cont [3/8] 0, 128
      %612 = vxpose.xlu0.c.b16.cont [4/8] 0, 128
      %613 = vxpose.xlu0.c.b16.cont [5/8] 0, 128
      %614 = vxpose.xlu0.c.b16.cont [6/8] 0, 128
      %615 = vxpose.xlu0.c.b16.cont [7/8] 0, 128
      %616 = vxpose.xlu0.c.b16.end [8/8] 0, 128
      %v617 = vpop.trf.xlu0
      %v618 = vpop.trf.xlu0
      %v619 = vpop.trf.xlu0
      %v620 = vpop.trf.xlu0
      %v621 = vpop.trf.xlu0
      %v622 = vpop.trf.xlu0
      %v623 = vpop.trf.xlu0
      %v624 = vpop.trf.xlu0
      %625 = vxpose.xlu0.c.b16.start [1/8] %v608, 128
      %626 = vxpose.xlu0.c.b16.cont [2/8] 0, 128
      %627 = vxpose.xlu0.c.b16.cont [3/8] 0, 128
      %628 = vxpose.xlu0.c.b16.cont [4/8] 0, 128
      %629 = vxpose.xlu0.c.b16.cont [5/8] 0, 128
      %630 = vxpose.xlu0.c.b16.cont [6/8] 0, 128
      %631 = vxpose.xlu0.c.b16.cont [7/8] 0, 128
      %632 = vxpose.xlu0.c.b16.end [8/8] 0, 128
      %v633 = vpop.trf.xlu0
      %v634 = vpop.trf.xlu0
      %v635 = vpop.trf.xlu0
      %v636 = vpop.trf.xlu0
      %v637 = vpop.trf.xlu0
      %v638 = vpop.trf.xlu0
      %v639 = vpop.trf.xlu0
      %v640 = vpop.trf.xlu0
      %vm641 = vcmask 31744
      %v643 = vsel %vm641, %v617, 0
      %v646 = vsel %vm641, %v618, 0
      %v649 = vsel %vm641, %v619, 0
      %v652 = vsel %vm641, %v620, 0
      %v655 = vsel %vm641, %v621, 0
      %v658 = vsel %vm641, %v622, 0
      %v661 = vsel %vm641, %v623, 0
      %v664 = vsel %vm641, %v624, 0
      %v667 = vsel %vm641, %v633, 0
      %v670 = vsel %vm641, %v634, 0
      %v673 = vsel %vm641, %v635, 0
      %v676 = vsel %vm641, %v636, 0
      %v679 = vsel %vm641, %v637, 0
      %v682 = vsel %vm641, %v638, 0
      %v685 = vsel %vm641, %v639, 0
      %v688 = vsel %vm641, %v640, 0
      %vm690 = vcmask 1041408
      %v692 = vsel %vm690, %v554, 0
      %v695 = vsel %vm690, %v555, 0
      %697 = vmatprep.subr.bf16.mxu0 %v695
      %698 = vmatpush1.bf16.msra.mxu0 %v692
      %699 = vmatprep.subr.bf16.mxu0 0
      %700 = vmatpush1.bf16.msra.mxu0 0
      %701 = vmatprep.subr.bf16.mxu0 0
      %702 = vmatpush1.bf16.msra.mxu0 0
      %703 = vmatprep.subr.bf16.mxu0 0
      %704 = vmatpush1.bf16.msra.mxu0 0
      %705 = vmatprep.subr.bf16.mxu0 0
      %706 = vmatpush1.bf16.msra.mxu0 0
      %707 = vmatprep.subr.bf16.mxu0 0
      %708 = vmatpush1.bf16.msra.mxu0 0
      %709 = vmatprep.subr.bf16.mxu0 0
      %710 = vmatpush1.bf16.msra.mxu0 0
      %711 = vmatprep.subr.bf16.mxu0 0
      %712 = vmatpush1.bf16.msra.mxu0 0
      %713 = vmatprep.subr.bf16.mxu0 0
      %714 = vmatpush1.bf16.msra.mxu0 0
      %715 = vmatprep.subr.bf16.mxu0 0
      %716 = vmatpush1.bf16.msra.mxu0 0
      %717 = vmatprep.subr.bf16.mxu0 0
      %718 = vmatpush1.bf16.msra.mxu0 0
      %719 = vmatprep.subr.bf16.mxu0 0
      %720 = vmatpush1.bf16.msra.mxu0 0
      %721 = vmatprep.subr.bf16.mxu0 0
      %722 = vmatpush1.bf16.msra.mxu0 0
      %723 = vmatprep.subr.bf16.mxu0 0
      %724 = vmatpush1.bf16.msra.mxu0 0
      %725 = vmatprep.subr.bf16.mxu0 0
      %726 = vmatpush1.bf16.msra.mxu0 0
      %727 = vmatprep.subr.bf16.mxu0 0
      %728 = vmatpush1.bf16.msra.mxu0 0
      %729 = vmatprep.mubr.bf16.mxu0 0
      %730 = vmatmul.mubr.bf16.gmra.mrb[0].mxu0 %v643
      %v731 = vpop.f32.mrb[0].mxu0
      %v732 = vadd.f32 0.0, %v731
      %v733 = vpop.f32.mrb[0].mxu0
      %v734 = vadd.f32 0.0, %v733
      %v735 = vpop.f32.mrb[0].mxu0
      %v736 = vadd.f32 0.0, %v735
      %v737 = vpop.f32.mrb[0].mxu0
      %v738 = vadd.f32 0.0, %v737
      %739 = vmatprep.mubr.bf16.mxu0 0
      %740 = vmatmul.mubr.bf16.gmra.mrb[0].mxu0 %v646
      %v741 = vpop.f32.mrb[0].mxu0
      %v742 = vadd.f32 0.0, %v741
      %v743 = vpop.f32.mrb[0].mxu0
      %v744 = vadd.f32 0.0, %v743
      %v745 = vpop.f32.mrb[0].mxu0
      %v746 = vadd.f32 0.0, %v745
      %v747 = vpop.f32.mrb[0].mxu0
      %v748 = vadd.f32 0.0, %v747
      %749 = vmatprep.mubr.bf16.mxu0 0
      %750 = vmatmul.mubr.bf16.gmra.mrb[0].mxu0 %v649
      %v751 = vpop.f32.mrb[0].mxu0
      %v752 = vadd.f32 0.0, %v751
      %v753 = vpop.f32.mrb[0].mxu0
      %v754 = vadd.f32 0.0, %v753
      %v755 = vpop.f32.mrb[0].mxu0
      %v756 = vadd.f32 0.0, %v755
      %v757 = vpop.f32.mrb[0].mxu0
      %v758 = vadd.f32 0.0, %v757
      %759 = vmatprep.mubr.bf16.mxu0 0
      %760 = vmatmul.mubr.bf16.gmra.mrb[0].mxu0 %v652
      %v761 = vpop.f32.mrb[0].mxu0
      %v762 = vadd.f32 0.0, %v761
      %v763 = vpop.f32.mrb[0].mxu0
      %v764 = vadd.f32 0.0, %v763
      %v765 = vpop.f32.mrb[0].mxu0
      %v766 = vadd.f32 0.0, %v765
      %v767 = vpop.f32.mrb[0].mxu0
      %v768 = vadd.f32 0.0, %v767
      %769 = vmatprep.mubr.bf16.mxu0 0
      %770 = vmatmul.mubr.bf16.gmra.mrb[0].mxu0 %v655
      %v771 = vpop.f32.mrb[0].mxu0
      %v772 = vadd.f32 0.0, %v771
      %v773 = vpop.f32.mrb[0].mxu0
      %v774 = vadd.f32 0.0, %v773
      %v775 = vpop.f32.mrb[0].mxu0
      %v776 = vadd.f32 0.0, %v775
      %v777 = vpop.f32.mrb[0].mxu0
      %v778 = vadd.f32 0.0, %v777
      %779 = vmatprep.mubr.bf16.mxu0 0
      %780 = vmatmul.mubr.bf16.gmra.mrb[0].mxu0 %v658
      %v781 = vpop.f32.mrb[0].mxu0
      %v782 = vadd.f32 0.0, %v781
      %v783 = vpop.f32.mrb[0].mxu0
      %v784 = vadd.f32 0.0, %v783
      %v785 = vpop.f32.mrb[0].mxu0
      %v786 = vadd.f32 0.0, %v785
      %v787 = vpop.f32.mrb[0].mxu0
      %v788 = vadd.f32 0.0, %v787
      %789 = vmatprep.mubr.bf16.mxu0 0
      %790 = vmatmul.mubr.bf16.gmra.mrb[0].mxu0 %v661
      %v791 = vpop.f32.mrb[0].mxu0
      %v792 = vadd.f32 0.0, %v791
      %v793 = vpop.f32.mrb[0].mxu0
      %v794 = vadd.f32 0.0, %v793
      %v795 = vpop.f32.mrb[0].mxu0
      %v796 = vadd.f32 0.0, %v795
      %v797 = vpop.f32.mrb[0].mxu0
      %v798 = vadd.f32 0.0, %v797
      %799 = vmatprep.mubr.bf16.mxu0 0
      %800 = vmatmul.mubr.bf16.gmra.mrb[0].mxu0 %v664
      %v801 = vpop.f32.mrb[0].mxu0
      %v802 = vadd.f32 0.0, %v801
      %v803 = vpop.f32.mrb[0].mxu0
      %v804 = vadd.f32 0.0, %v803
      %v805 = vpop.f32.mrb[0].mxu0
      %v806 = vadd.f32 0.0, %v805
      %v807 = vpop.f32.mrb[0].mxu0
      %v808 = vadd.f32 0.0, %v807
      %809 = vmatprep.mubr.bf16.mxu0 0
      %810 = vmatmul.mubr.bf16.gmra.mrb[0].mxu0 %v667
      %v811 = vpop.f32.mrb[0].mxu0
      %v812 = vadd.f32 0.0, %v811
      %v813 = vpop.f32.mrb[0].mxu0
      %v814 = vadd.f32 0.0, %v813
      %v815 = vpop.f32.mrb[0].mxu0
      %v816 = vadd.f32 0.0, %v815
      %v817 = vpop.f32.mrb[0].mxu0
      %v818 = vadd.f32 0.0, %v817
      %819 = vmatprep.mubr.bf16.mxu0 0
      %820 = vmatmul.mubr.bf16.gmra.mrb[0].mxu0 %v670
      %v821 = vpop.f32.mrb[0].mxu0
      %v822 = vadd.f32 0.0, %v821
      %v823 = vpop.f32.mrb[0].mxu0
      %v824 = vadd.f32 0.0, %v823
      %v825 = vpop.f32.mrb[0].mxu0
      %v826 = vadd.f32 0.0, %v825
      %v827 = vpop.f32.mrb[0].mxu0
      %v828 = vadd.f32 0.0, %v827
      %829 = vmatprep.mubr.bf16.mxu0 0
      %830 = vmatmul.mubr.bf16.gmra.mrb[0].mxu0 %v673
      %v831 = vpop.f32.mrb[0].mxu0
      %v832 = vadd.f32 0.0, %v831
      %v833 = vpop.f32.mrb[0].mxu0
      %v834 = vadd.f32 0.0, %v833
      %v835 = vpop.f32.mrb[0].mxu0
      %v836 = vadd.f32 0.0, %v835
      %v837 = vpop.f32.mrb[0].mxu0
      %v838 = vadd.f32 0.0, %v837
      %839 = vmatprep.mubr.bf16.mxu0 0
      %840 = vmatmul.mubr.bf16.gmra.mrb[0].mxu0 %v676
      %v841 = vpop.f32.mrb[0].mxu0
      %v842 = vadd.f32 0.0, %v841
      %v843 = vpop.f32.mrb[0].mxu0
      %v844 = vadd.f32 0.0, %v843
      %v845 = vpop.f32.mrb[0].mxu0
      %v846 = vadd.f32 0.0, %v845
      %v847 = vpop.f32.mrb[0].mxu0
      %v848 = vadd.f32 0.0, %v847
      %849 = vmatprep.mubr.bf16.mxu0 0
      %850 = vmatmul.mubr.bf16.gmra.mrb[0].mxu0 %v679
      %v851 = vpop.f32.mrb[0].mxu0
      %v852 = vadd.f32 0.0, %v851
      %v853 = vpop.f32.mrb[0].mxu0
      %v854 = vadd.f32 0.0, %v853
      %v855 = vpop.f32.mrb[0].mxu0
      %v856 = vadd.f32 0.0, %v855
      %v857 = vpop.f32.mrb[0].mxu0
      %v858 = vadd.f32 0.0, %v857
      %859 = vmatprep.mubr.bf16.mxu0 0
      %860 = vmatmul.mubr.bf16.gmra.mrb[0].mxu0 %v682
      %v861 = vpop.f32.mrb[0].mxu0
      %v862 = vadd.f32 0.0, %v861
      %v863 = vpop.f32.mrb[0].mxu0
      %v864 = vadd.f32 0.0, %v863
      %v865 = vpop.f32.mrb[0].mxu0
      %v866 = vadd.f32 0.0, %v865
      %v867 = vpop.f32.mrb[0].mxu0
      %v868 = vadd.f32 0.0, %v867
      %869 = vmatprep.mubr.bf16.mxu0 0
      %870 = vmatmul.mubr.bf16.gmra.mrb[0].mxu0 %v685
      %v871 = vpop.f32.mrb[0].mxu0
      %v872 = vadd.f32 0.0, %v871
      %v873 = vpop.f32.mrb[0].mxu0
      %v874 = vadd.f32 0.0, %v873
      %v875 = vpop.f32.mrb[0].mxu0
      %v876 = vadd.f32 0.0, %v875
      %v877 = vpop.f32.mrb[0].mxu0
      %v878 = vadd.f32 0.0, %v877
      %879 = vmatprep.mubr.bf16.mxu0 0
      %880 = vmatmul.mubr.bf16.gmra.mrb[0].mxu0 %v688
      %v881 = vpop.f32.mrb[0].mxu0
      %v882 = vadd.f32 0.0, %v881
      %v883 = vpop.f32.mrb[0].mxu0
      %v884 = vadd.f32 0.0, %v883
      %v885 = vpop.f32.mrb[0].mxu0
      %v886 = vadd.f32 0.0, %v885
      %v887 = vpop.f32.mrb[0].mxu0
      %v888 = vadd.f32 0.0, %v887
      %889 = vdwg.mxu0
      %v890 = vmax.f32 %v732, %v734
      %891 = vmax.xlane.f32.xlu0 %v890
      %v892 = vpop.xlane.xlu0 %891
      %v893 = vmax.f32 %v736, %v738
      %894 = vmax.xlane.f32.xlu0 %v893
      %v895 = vpop.xlane.xlu0 %894
      %v896 = vmax.f32 %v742, %v744
      %897 = vmax.xlane.f32.xlu0 %v896
      %v898 = vpop.xlane.xlu0 %897
      %v899 = vmax.f32 %v746, %v748
      %900 = vmax.xlane.f32.xlu0 %v899
      %v901 = vpop.xlane.xlu0 %900
      %v902 = vmax.f32 %v752, %v754
      %903 = vmax.xlane.f32.xlu0 %v902
      %v904 = vpop.xlane.xlu0 %903
      %v905 = vmax.f32 %v756, %v758
      %906 = vmax.xlane.f32.xlu0 %v905
      %v907 = vpop.xlane.xlu0 %906
      %v908 = vmax.f32 %v762, %v764
      %909 = vmax.xlane.f32.xlu0 %v908
      %v910 = vpop.xlane.xlu0 %909
      %v911 = vmax.f32 %v766, %v768
      %912 = vmax.xlane.f32.xlu0 %v911
      %v913 = vpop.xlane.xlu0 %912
      %v914 = vmax.f32 %v772, %v774
      %915 = vmax.xlane.f32.xlu0 %v914
      %v916 = vpop.xlane.xlu0 %915
      %v917 = vmax.f32 %v776, %v778
      %918 = vmax.xlane.f32.xlu0 %v917
      %v919 = vpop.xlane.xlu0 %918
      %v920 = vmax.f32 %v782, %v784
      %921 = vmax.xlane.f32.xlu0 %v920
      %v922 = vpop.xlane.xlu0 %921
      %v923 = vmax.f32 %v786, %v788
      %924 = vmax.xlane.f32.xlu0 %v923
      %v925 = vpop.xlane.xlu0 %924
      %v926 = vmax.f32 %v792, %v794
      %927 = vmax.xlane.f32.xlu0 %v926
      %v928 = vpop.xlane.xlu0 %927
      %v929 = vmax.f32 %v796, %v798
      %930 = vmax.xlane.f32.xlu0 %v929
      %v931 = vpop.xlane.xlu0 %930
      %v932 = vmax.f32 %v802, %v804
      %933 = vmax.xlane.f32.xlu0 %v932
      %v934 = vpop.xlane.xlu0 %933
      %v935 = vmax.f32 %v806, %v808
      %936 = vmax.xlane.f32.xlu0 %v935
      %v937 = vpop.xlane.xlu0 %936
      %v938 = vmax.f32 %v812, %v814
      %939 = vmax.xlane.f32.xlu0 %v938
      %v940 = vpop.xlane.xlu0 %939
      %v941 = vmax.f32 %v816, %v818
      %942 = vmax.xlane.f32.xlu0 %v941
      %v943 = vpop.xlane.xlu0 %942
      %v944 = vmax.f32 %v822, %v824
      %945 = vmax.xlane.f32.xlu0 %v944
      %v946 = vpop.xlane.xlu0 %945
      %v947 = vmax.f32 %v826, %v828
      %948 = vmax.xlane.f32.xlu0 %v947
      %v949 = vpop.xlane.xlu0 %948
      %v950 = vmax.f32 %v832, %v834
      %951 = vmax.xlane.f32.xlu0 %v950
      %v952 = vpop.xlane.xlu0 %951
      %v953 = vmax.f32 %v836, %v838
      %954 = vmax.xlane.f32.xlu0 %v953
      %v955 = vpop.xlane.xlu0 %954
      %v956 = vmax.f32 %v842, %v844
      %957 = vmax.xlane.f32.xlu0 %v956
      %v958 = vpop.xlane.xlu0 %957
      %v959 = vmax.f32 %v846, %v848
      %960 = vmax.xlane.f32.xlu0 %v959
      %v961 = vpop.xlane.xlu0 %960
      %v962 = vmax.f32 %v852, %v854
      %963 = vmax.xlane.f32.xlu0 %v962
      %v964 = vpop.xlane.xlu0 %963
      %v965 = vmax.f32 %v856, %v858
      %966 = vmax.xlane.f32.xlu0 %v965
      %v967 = vpop.xlane.xlu0 %966
      %v968 = vmax.f32 %v862, %v864
      %969 = vmax.xlane.f32.xlu0 %v968
      %v970 = vpop.xlane.xlu0 %969
      %v971 = vmax.f32 %v866, %v868
      %972 = vmax.xlane.f32.xlu0 %v971
      %v973 = vpop.xlane.xlu0 %972
      %v974 = vmax.f32 %v872, %v874
      %975 = vmax.xlane.f32.xlu0 %v974
      %v976 = vpop.xlane.xlu0 %975
      %v977 = vmax.f32 %v876, %v878
      %978 = vmax.xlane.f32.xlu0 %v977
      %v979 = vpop.xlane.xlu0 %978
      %v980 = vmax.f32 %v882, %v884
      %981 = vmax.xlane.f32.xlu0 %v980
      %v982 = vpop.xlane.xlu0 %981
      %v983 = vmax.f32 %v886, %v888
      %984 = vmax.xlane.f32.xlu0 %v983
      %v985 = vpop.xlane.xlu0 %984
      %v986 = vsub.f32 %v732, %v892
      %v987 = vsub.f32 %v734, %v892
      %v988 = vsub.f32 %v736, %v895
      %v989 = vsub.f32 %v738, %v895
      %v990 = vsub.f32 %v742, %v898
      %v991 = vsub.f32 %v744, %v898
      %v992 = vsub.f32 %v746, %v901
      %v993 = vsub.f32 %v748, %v901
      %v994 = vsub.f32 %v752, %v904
      %v995 = vsub.f32 %v754, %v904
      %v996 = vsub.f32 %v756, %v907
      %v997 = vsub.f32 %v758, %v907
      %v998 = vsub.f32 %v762, %v910
      %v999 = vsub.f32 %v764, %v910
      %v1000 = vsub.f32 %v766, %v913
      %v1001 = vsub.f32 %v768, %v913
      %v1002 = vsub.f32 %v772, %v916
      %v1003 = vsub.f32 %v774, %v916
      %v1004 = vsub.f32 %v776, %v919
      %v1005 = vsub.f32 %v778, %v919
      %v1006 = vsub.f32 %v782, %v922
      %v1007 = vsub.f32 %v784, %v922
      %v1008 = vsub.f32 %v786, %v925
      %v1009 = vsub.f32 %v788, %v925
      %v1010 = vsub.f32 %v792, %v928
      %v1011 = vsub.f32 %v794, %v928
      %v1012 = vsub.f32 %v796, %v931
      %v1013 = vsub.f32 %v798, %v931
      %v1014 = vsub.f32 %v802, %v934
      %v1015 = vsub.f32 %v804, %v934
      %v1016 = vsub.f32 %v806, %v937
      %v1017 = vsub.f32 %v808, %v937
      %v1018 = vsub.f32 %v812, %v940
      %v1019 = vsub.f32 %v814, %v940
      %v1020 = vsub.f32 %v816, %v943
      %v1021 = vsub.f32 %v818, %v943
      %v1022 = vsub.f32 %v822, %v946
      %v1023 = vsub.f32 %v824, %v946
      %v1024 = vsub.f32 %v826, %v949
      %v1025 = vsub.f32 %v828, %v949
      %v1026 = vsub.f32 %v832, %v952
      %v1027 = vsub.f32 %v834, %v952
      %v1028 = vsub.f32 %v836, %v955
      %v1029 = vsub.f32 %v838, %v955
      %v1030 = vsub.f32 %v842, %v958
      %v1031 = vsub.f32 %v844, %v958
      %v1032 = vsub.f32 %v846, %v961
      %v1033 = vsub.f32 %v848, %v961
      %v1034 = vsub.f32 %v852, %v964
      %v1035 = vsub.f32 %v854, %v964
      %v1036 = vsub.f32 %v856, %v967
      %v1037 = vsub.f32 %v858, %v967
      %v1038 = vsub.f32 %v862, %v970
      %v1039 = vsub.f32 %v864, %v970
      %v1040 = vsub.f32 %v866, %v973
      %v1041 = vsub.f32 %v868, %v973
      %v1042 = vsub.f32 %v872, %v976
      %v1043 = vsub.f32 %v874, %v976
      %v1044 = vsub.f32 %v876, %v979
      %v1045 = vsub.f32 %v878, %v979
      %v1046 = vsub.f32 %v882, %v982
      %v1047 = vsub.f32 %v884, %v982
      %v1048 = vsub.f32 %v886, %v985
      %v1049 = vsub.f32 %v888, %v985
      %v1050 = vmul.f32 %v986, 1.442695
      %v1051 = vpow.pop %v1050
      %v1052 = vmul.f32 %v987, 1.442695
      %v1053 = vpow.pop %v1052
      %v1054 = vmul.f32 %v988, 1.442695
      %v1055 = vpow.pop %v1054
      %v1056 = vmul.f32 %v989, 1.442695
      %v1057 = vpow.pop %v1056
      %v1058 = vmul.f32 %v990, 1.442695
      %v1059 = vpow.pop %v1058
      %v1060 = vmul.f32 %v991, 1.442695
      %v1061 = vpow.pop %v1060
      %v1062 = vmul.f32 %v992, 1.442695
      %v1063 = vpow.pop %v1062
      %v1064 = vmul.f32 %v993, 1.442695
      %v1065 = vpow.pop %v1064
      %v1066 = vmul.f32 %v994, 1.442695
      %v1067 = vpow.pop %v1066
      %v1068 = vmul.f32 %v995, 1.442695
      %v1069 = vpow.pop %v1068
      %v1070 = vmul.f32 %v996, 1.442695
      %v1071 = vpow.pop %v1070
      %v1072 = vmul.f32 %v997, 1.442695
      %v1073 = vpow.pop %v1072
      %v1074 = vmul.f32 %v998, 1.442695
      %v1075 = vpow.pop %v1074
      %v1076 = vmul.f32 %v999, 1.442695
      %v1077 = vpow.pop %v1076
      %v1078 = vmul.f32 %v1000, 1.442695
      %v1079 = vpow.pop %v1078
      %v1080 = vmul.f32 %v1001, 1.442695
      %v1081 = vpow.pop %v1080
      %v1082 = vmul.f32 %v1002, 1.442695
      %v1083 = vpow.pop %v1082
      %v1084 = vmul.f32 %v1003, 1.442695
      %v1085 = vpow.pop %v1084
      %v1086 = vmul.f32 %v1004, 1.442695
      %v1087 = vpow.pop %v1086
      %v1088 = vmul.f32 %v1005, 1.442695
      %v1089 = vpow.pop %v1088
      %v1090 = vmul.f32 %v1006, 1.442695
      %v1091 = vpow.pop %v1090
      %v1092 = vmul.f32 %v1007, 1.442695
      %v1093 = vpow.pop %v1092
      %v1094 = vmul.f32 %v1008, 1.442695
      %v1095 = vpow.pop %v1094
      %v1096 = vmul.f32 %v1009, 1.442695
      %v1097 = vpow.pop %v1096
      %v1098 = vmul.f32 %v1010, 1.442695
      %v1099 = vpow.pop %v1098
      %v1100 = vmul.f32 %v1011, 1.442695
      %v1101 = vpow.pop %v1100
      %v1102 = vmul.f32 %v1012, 1.442695
      %v1103 = vpow.pop %v1102
      %v1104 = vmul.f32 %v1013, 1.442695
      %v1105 = vpow.pop %v1104
      %v1106 = vmul.f32 %v1014, 1.442695
      %v1107 = vpow.pop %v1106
      %v1108 = vmul.f32 %v1015, 1.442695
      %v1109 = vpow.pop %v1108
      %v1110 = vmul.f32 %v1016, 1.442695
      %v1111 = vpow.pop %v1110
      %v1112 = vmul.f32 %v1017, 1.442695
      %v1113 = vpow.pop %v1112
      %v1114 = vmul.f32 %v1018, 1.442695
      %v1115 = vpow.pop %v1114
      %v1116 = vmul.f32 %v1019, 1.442695
      %v1117 = vpow.pop %v1116
      %v1118 = vmul.f32 %v1020, 1.442695
      %v1119 = vpow.pop %v1118
      %v1120 = vmul.f32 %v1021, 1.442695
      %v1121 = vpow.pop %v1120
      %v1122 = vmul.f32 %v1022, 1.442695
      %v1123 = vpow.pop %v1122
      %v1124 = vmul.f32 %v1023, 1.442695
      %v1125 = vpow.pop %v1124
      %v1126 = vmul.f32 %v1024, 1.442695
      %v1127 = vpow.pop %v1126
      %v1128 = vmul.f32 %v1025, 1.442695
      %v1129 = vpow.pop %v1128
      %v1130 = vmul.f32 %v1026, 1.442695
      %v1131 = vpow.pop %v1130
      %v1132 = vmul.f32 %v1027, 1.442695
      %v1133 = vpow.pop %v1132
      %v1134 = vmul.f32 %v1028, 1.442695
      %v1135 = vpow.pop %v1134
      %v1136 = vmul.f32 %v1029, 1.442695
      %v1137 = vpow.pop %v1136
      %v1138 = vmul.f32 %v1030, 1.442695
      %v1139 = vpow.pop %v1138
      %v1140 = vmul.f32 %v1031, 1.442695
      %v1141 = vpow.pop %v1140
      %v1142 = vmul.f32 %v1032, 1.442695
      %v1143 = vpow.pop %v1142
      %v1144 = vmul.f32 %v1033, 1.442695
      %v1145 = vpow.pop %v1144
      %v1146 = vmul.f32 %v1034, 1.442695
      %v1147 = vpow.pop %v1146
      %v1148 = vmul.f32 %v1035, 1.442695
      %v1149 = vpow.pop %v1148
      %v1150 = vmul.f32 %v1036, 1.442695
      %v1151 = vpow.pop %v1150
      %v1152 = vmul.f32 %v1037, 1.442695
      %v1153 = vpow.pop %v1152
      %v1154 = vmul.f32 %v1038, 1.442695
      %v1155 = vpow.pop %v1154
      %v1156 = vmul.f32 %v1039, 1.442695
      %v1157 = vpow.pop %v1156
      %v1158 = vmul.f32 %v1040, 1.442695
      %v1159 = vpow.pop %v1158
      %v1160 = vmul.f32 %v1041, 1.442695
      %v1161 = vpow.pop %v1160
      %v1162 = vmul.f32 %v1042, 1.442695
      %v1163 = vpow.pop %v1162
      %v1164 = vmul.f32 %v1043, 1.442695
      %v1165 = vpow.pop %v1164
      %v1166 = vmul.f32 %v1044, 1.442695
      %v1167 = vpow.pop %v1166
      %v1168 = vmul.f32 %v1045, 1.442695
      %v1169 = vpow.pop %v1168
      %v1170 = vmul.f32 %v1046, 1.442695
      %v1171 = vpow.pop %v1170
      %v1172 = vmul.f32 %v1047, 1.442695
      %v1173 = vpow.pop %v1172
      %v1174 = vmul.f32 %v1048, 1.442695
      %v1175 = vpow.pop %v1174
      %v1176 = vmul.f32 %v1049, 1.442695
      %v1177 = vpow.pop %v1176
      %v1178 = vpack.c.bf16 %v1055, %v1051
      %v1179 = vpack.c.bf16 %v1057, %v1053
      %v1180 = vpack.c.bf16 %v1063, %v1059
      %v1181 = vpack.c.bf16 %v1065, %v1061
      %v1182 = vpack.c.bf16 %v1071, %v1067
      %v1183 = vpack.c.bf16 %v1073, %v1069
      %v1184 = vpack.c.bf16 %v1079, %v1075
      %v1185 = vpack.c.bf16 %v1081, %v1077
      %v1186 = vpack.c.bf16 %v1087, %v1083
      %v1187 = vpack.c.bf16 %v1089, %v1085
      %v1188 = vpack.c.bf16 %v1095, %v1091
      %v1189 = vpack.c.bf16 %v1097, %v1093
      %v1190 = vpack.c.bf16 %v1103, %v1099
      %v1191 = vpack.c.bf16 %v1105, %v1101
      %v1192 = vpack.c.bf16 %v1111, %v1107
      %v1193 = vpack.c.bf16 %v1113, %v1109
      %v1194 = vpack.c.bf16 %v1119, %v1115
      %v1195 = vpack.c.bf16 %v1121, %v1117
      %v1196 = vpack.c.bf16 %v1127, %v1123
      %v1197 = vpack.c.bf16 %v1129, %v1125
      %v1198 = vpack.c.bf16 %v1135, %v1131
      %v1199 = vpack.c.bf16 %v1137, %v1133
      %v1200 = vpack.c.bf16 %v1143, %v1139
      %v1201 = vpack.c.bf16 %v1145, %v1141
      %v1202 = vpack.c.bf16 %v1151, %v1147
      %v1203 = vpack.c.bf16 %v1153, %v1149
      %v1204 = vpack.c.bf16 %v1159, %v1155
      %v1205 = vpack.c.bf16 %v1161, %v1157
      %v1206 = vpack.c.bf16 %v1167, %v1163
      %v1207 = vpack.c.bf16 %v1169, %v1165
      %v1208 = vpack.c.bf16 %v1175, %v1171
      %v1209 = vpack.c.bf16 %v1177, %v1173
      %1210 = vmatprep.subr.bf16.mxu0 %v502
      %1211 = vmatpush1.bf16.xpose.msra.mxu0 %v501
      %1212 = vmatprep.subr.bf16.mxu0 0
      %1213 = vmatpush1.bf16.xpose.msra.mxu0 0
      %1214 = vmatprep.subr.bf16.mxu0 0
      %1215 = vmatpush1.bf16.xpose.msra.mxu0 0
      %1216 = vmatprep.subr.bf16.mxu0 0
      %1217 = vmatpush1.bf16.xpose.msra.mxu0 0
      %1218 = vmatprep.subr.bf16.mxu0 0
      %1219 = vmatpush1.bf16.xpose.msra.mxu0 0
      %1220 = vmatprep.subr.bf16.mxu0 0
      %1221 = vmatpush1.bf16.xpose.msra.mxu0 0
      %1222 = vmatprep.subr.bf16.mxu0 0
      %1223 = vmatpush1.bf16.xpose.msra.mxu0 0
      %1224 = vmatprep.subr.bf16.mxu0 0
      %1225 = vmatpush1.bf16.xpose.msra.mxu0 0
      %1226 = vmatprep.subr.bf16.mxu0 0
      %1227 = vmatpush1.bf16.xpose.msra.mxu0 0
      %1228 = vmatprep.subr.bf16.mxu0 0
      %1229 = vmatpush1.bf16.xpose.msra.mxu0 0
      %1230 = vmatprep.subr.bf16.mxu0 0
      %1231 = vmatpush1.bf16.xpose.msra.mxu0 0
      %1232 = vmatprep.subr.bf16.mxu0 0
      %1233 = vmatpush1.bf16.xpose.msra.mxu0 0
      %1234 = vmatprep.subr.bf16.mxu0 0
      %1235 = vmatpush1.bf16.xpose.msra.mxu0 0
      %1236 = vmatprep.subr.bf16.mxu0 0
      %1237 = vmatpush1.bf16.xpose.msra.mxu0 0
      %1238 = vmatprep.subr.bf16.mxu0 0
      %1239 = vmatpush1.bf16.xpose.msra.mxu0 0
      %1240 = vmatprep.subr.bf16.mxu0 0
      %1241 = vmatpush1.bf16.xpose.msra.mxu0 0
      %1242 = vmatprep.mubr.bf16.mxu0 %v1179
      %1243 = vmatmul.mubr.bf16.gmra.mrb[0].mxu0 %v1178
      %v1244 = vpop.f32.mrb[0].mxu0
      %v1245 = vadd.f32 0.0, %v1244
      %v1246 = vpop.f32.mrb[0].mxu0
      %v1247 = vpop.f32.mrb[0].mxu0
      %v1248 = vadd.f32 0.0, %v1247
      %v1249 = vpop.f32.mrb[0].mxu0
      %1250 = vmatprep.mubr.bf16.mxu0 %v1181
      %1251 = vmatmul.mubr.bf16.gmra.mrb[0].mxu0 %v1180
      %v1252 = vpop.f32.mrb[0].mxu0
      %v1253 = vadd.f32 0.0, %v1252
      %v1254 = vpop.f32.mrb[0].mxu0
      %v1255 = vpop.f32.mrb[0].mxu0
      %v1256 = vadd.f32 0.0, %v1255
      %v1257 = vpop.f32.mrb[0].mxu0
      %1258 = vmatprep.mubr.bf16.mxu0 %v1183
      %1259 = vmatmul.mubr.bf16.gmra.mrb[0].mxu0 %v1182
      %v1260 = vpop.f32.mrb[0].mxu0
      %v1261 = vadd.f32 0.0, %v1260
      %v1262 = vpop.f32.mrb[0].mxu0
      %v1263 = vpop.f32.mrb[0].mxu0
      %v1264 = vadd.f32 0.0, %v1263
      %v1265 = vpop.f32.mrb[0].mxu0
      %1266 = vmatprep.mubr.bf16.mxu0 %v1185
      %1267 = vmatmul.mubr.bf16.gmra.mrb[0].mxu0 %v1184
      %v1268 = vpop.f32.mrb[0].mxu0
      %v1269 = vadd.f32 0.0, %v1268
      %v1270 = vpop.f32.mrb[0].mxu0
      %v1271 = vpop.f32.mrb[0].mxu0
      %v1272 = vadd.f32 0.0, %v1271
      %v1273 = vpop.f32.mrb[0].mxu0
      %1274 = vmatprep.mubr.bf16.mxu0 %v1187
      %1275 = vmatmul.mubr.bf16.gmra.mrb[0].mxu0 %v1186
      %v1276 = vpop.f32.mrb[0].mxu0
      %v1277 = vadd.f32 0.0, %v1276
      %v1278 = vpop.f32.mrb[0].mxu0
      %v1279 = vpop.f32.mrb[0].mxu0
      %v1280 = vadd.f32 0.0, %v1279
      %v1281 = vpop.f32.mrb[0].mxu0
      %1282 = vmatprep.mubr.bf16.mxu0 %v1189
      %1283 = vmatmul.mubr.bf16.gmra.mrb[0].mxu0 %v1188
      %v1284 = vpop.f32.mrb[0].mxu0
      %v1285 = vadd.f32 0.0, %v1284
      %v1286 = vpop.f32.mrb[0].mxu0
      %v1287 = vpop.f32.mrb[0].mxu0
      %v1288 = vadd.f32 0.0, %v1287
      %v1289 = vpop.f32.mrb[0].mxu0
      %1290 = vmatprep.mubr.bf16.mxu0 %v1191
      %1291 = vmatmul.mubr.bf16.gmra.mrb[0].mxu0 %v1190
      %v1292 = vpop.f32.mrb[0].mxu0
      %v1293 = vadd.f32 0.0, %v1292
      %v1294 = vpop.f32.mrb[0].mxu0
      %v1295 = vpop.f32.mrb[0].mxu0
      %v1296 = vadd.f32 0.0, %v1295
      %v1297 = vpop.f32.mrb[0].mxu0
      %1298 = vmatprep.mubr.bf16.mxu0 %v1193
      %1299 = vmatmul.mubr.bf16.gmra.mrb[0].mxu0 %v1192
      %v1300 = vpop.f32.mrb[0].mxu0
      %v1301 = vadd.f32 0.0, %v1300
      %v1302 = vpop.f32.mrb[0].mxu0
      %v1303 = vpop.f32.mrb[0].mxu0
      %v1304 = vadd.f32 0.0, %v1303
      %v1305 = vpop.f32.mrb[0].mxu0
      %1306 = vmatprep.mubr.bf16.mxu0 %v1195
      %1307 = vmatmul.mubr.bf16.gmra.mrb[0].mxu0 %v1194
      %v1308 = vpop.f32.mrb[0].mxu0
      %v1309 = vadd.f32 0.0, %v1308
      %v1310 = vpop.f32.mrb[0].mxu0
      %v1311 = vpop.f32.mrb[0].mxu0
      %v1312 = vadd.f32 0.0, %v1311
      %v1313 = vpop.f32.mrb[0].mxu0
      %1314 = vmatprep.mubr.bf16.mxu0 %v1197
      %1315 = vmatmul.mubr.bf16.gmra.mrb[0].mxu0 %v1196
      %v1316 = vpop.f32.mrb[0].mxu0
      %v1317 = vadd.f32 0.0, %v1316
      %v1318 = vpop.f32.mrb[0].mxu0
      %v1319 = vpop.f32.mrb[0].mxu0
      %v1320 = vadd.f32 0.0, %v1319
      %v1321 = vpop.f32.mrb[0].mxu0
      %1322 = vmatprep.mubr.bf16.mxu0 %v1199
      %1323 = vmatmul.mubr.bf16.gmra.mrb[0].mxu0 %v1198
      %v1324 = vpop.f32.mrb[0].mxu0
      %v1325 = vadd.f32 0.0, %v1324
      %v1326 = vpop.f32.mrb[0].mxu0
      %v1327 = vpop.f32.mrb[0].mxu0
      %v1328 = vadd.f32 0.0, %v1327
      %v1329 = vpop.f32.mrb[0].mxu0
      %1330 = vmatprep.mubr.bf16.mxu0 %v1201
      %1331 = vmatmul.mubr.bf16.gmra.mrb[0].mxu0 %v1200
      %v1332 = vpop.f32.mrb[0].mxu0
      %v1333 = vadd.f32 0.0, %v1332
      %v1334 = vpop.f32.mrb[0].mxu0
      %v1335 = vpop.f32.mrb[0].mxu0
      %v1336 = vadd.f32 0.0, %v1335
      %v1337 = vpop.f32.mrb[0].mxu0
      %1338 = vmatprep.mubr.bf16.mxu0 %v1203
      %1339 = vmatmul.mubr.bf16.gmra.mrb[0].mxu0 %v1202
      %v1340 = vpop.f32.mrb[0].mxu0
      %v1341 = vadd.f32 0.0, %v1340
      %v1342 = vpop.f32.mrb[0].mxu0
      %v1343 = vpop.f32.mrb[0].mxu0
      %v1344 = vadd.f32 0.0, %v1343
      %v1345 = vpop.f32.mrb[0].mxu0
      %1346 = vmatprep.mubr.bf16.mxu0 %v1205
      %1347 = vmatmul.mubr.bf16.gmra.mrb[0].mxu0 %v1204
      %v1348 = vpop.f32.mrb[0].mxu0
      %v1349 = vadd.f32 0.0, %v1348
      %v1350 = vpop.f32.mrb[0].mxu0
      %v1351 = vpop.f32.mrb[0].mxu0
      %v1352 = vadd.f32 0.0, %v1351
      %v1353 = vpop.f32.mrb[0].mxu0
      %1354 = vmatprep.mubr.bf16.mxu0 %v1207
      %1355 = vmatmul.mubr.bf16.gmra.mrb[0].mxu0 %v1206
      %v1356 = vpop.f32.mrb[0].mxu0
      %v1357 = vadd.f32 0.0, %v1356
      %v1358 = vpop.f32.mrb[0].mxu0
      %v1359 = vpop.f32.mrb[0].mxu0
      %v1360 = vadd.f32 0.0, %v1359
      %v1361 = vpop.f32.mrb[0].mxu0
      %1362 = vmatprep.mubr.bf16.mxu0 %v1209
      %1363 = vmatmul.mubr.bf16.gmra.mrb[0].mxu0 %v1208
      %v1364 = vpop.f32.mrb[0].mxu0
      %v1365 = vadd.f32 0.0, %v1364
      %v1366 = vpop.f32.mrb[0].mxu0
      %v1367 = vpop.f32.mrb[0].mxu0
      %v1368 = vadd.f32 0.0, %v1367
      %v1369 = vpop.f32.mrb[0].mxu0
      %1370 = vdwg.mxu0
      %v1371 = vrcp.pop %v1245
      %v1372 = vrcp.pop %v1248
      %v1373 = vrcp.pop %v1253
      %v1374 = vrcp.pop %v1256
      %v1375 = vrcp.pop %v1261
      %v1376 = vrcp.pop %v1264
      %v1377 = vrcp.pop %v1269
      %v1378 = vrcp.pop %v1272
      %v1379 = vrcp.pop %v1277
      %v1380 = vrcp.pop %v1280
      %v1381 = vrcp.pop %v1285
      %v1382 = vrcp.pop %v1288
      %v1383 = vrcp.pop %v1293
      %v1384 = vrcp.pop %v1296
      %v1385 = vrcp.pop %v1301
      %v1386 = vrcp.pop %v1304
      %v1387 = vrcp.pop %v1309
      %v1388 = vrcp.pop %v1312
      %v1389 = vrcp.pop %v1317
      %v1390 = vrcp.pop %v1320
      %v1391 = vrcp.pop %v1325
      %v1392 = vrcp.pop %v1328
      %v1393 = vrcp.pop %v1333
      %v1394 = vrcp.pop %v1336
      %v1395 = vrcp.pop %v1341
      %v1396 = vrcp.pop %v1344
      %v1397 = vrcp.pop %v1349
      %v1398 = vrcp.pop %v1352
      %v1399 = vrcp.pop %v1357
      %v1400 = vrcp.pop %v1360
      %v1401 = vrcp.pop %v1365
      %v1402 = vrcp.pop %v1368
      %1404 = vset.pattern.permute.xlu0 4
      %1405 = vperm.xlu0 %1404, %v1371
      %v1406 = vpop.permute.xlu0 %1405
      %1409 = vset.pattern.permute.xlu0 4
      %1410 = vperm.xlu0 %1409, %v1372
      %v1411 = vpop.permute.xlu0 %1410
      %1414 = vset.pattern.permute.xlu0 4
      %1415 = vperm.xlu0 %1414, %v1373
      %v1416 = vpop.permute.xlu0 %1415
      %1419 = vset.pattern.permute.xlu0 4
      %1420 = vperm.xlu0 %1419, %v1374
      %v1421 = vpop.permute.xlu0 %1420
      %1424 = vset.pattern.permute.xlu0 4
      %1425 = vperm.xlu0 %1424, %v1375
      %v1426 = vpop.permute.xlu0 %1425
      %1429 = vset.pattern.permute.xlu0 4
      %1430 = vperm.xlu0 %1429, %v1376
      %v1431 = vpop.permute.xlu0 %1430
      %1434 = vset.pattern.permute.xlu0 4
      %1435 = vperm.xlu0 %1434, %v1377
      %v1436 = vpop.permute.xlu0 %1435
      %1439 = vset.pattern.permute.xlu0 4
      %1440 = vperm.xlu0 %1439, %v1378
      %v1441 = vpop.permute.xlu0 %1440
      %1444 = vset.pattern.permute.xlu0 4
      %1445 = vperm.xlu0 %1444, %v1379
      %v1446 = vpop.permute.xlu0 %1445
      %1449 = vset.pattern.permute.xlu0 4
      %1450 = vperm.xlu0 %1449, %v1380
      %v1451 = vpop.permute.xlu0 %1450
      %1454 = vset.pattern.permute.xlu0 4
      %1455 = vperm.xlu0 %1454, %v1381
      %v1456 = vpop.permute.xlu0 %1455
      %1459 = vset.pattern.permute.xlu0 4
      %1460 = vperm.xlu0 %1459, %v1382
      %v1461 = vpop.permute.xlu0 %1460
      %1464 = vset.pattern.permute.xlu0 4
      %1465 = vperm.xlu0 %1464, %v1383
      %v1466 = vpop.permute.xlu0 %1465
      %1469 = vset.pattern.permute.xlu0 4
      %1470 = vperm.xlu0 %1469, %v1384
      %v1471 = vpop.permute.xlu0 %1470
      %1474 = vset.pattern.permute.xlu0 4
      %1475 = vperm.xlu0 %1474, %v1385
      %v1476 = vpop.permute.xlu0 %1475
      %1479 = vset.pattern.permute.xlu0 4
      %1480 = vperm.xlu0 %1479, %v1386
      %v1481 = vpop.permute.xlu0 %1480
      %1484 = vset.pattern.permute.xlu0 4
      %1485 = vperm.xlu0 %1484, %v1387
      %v1486 = vpop.permute.xlu0 %1485
      %1489 = vset.pattern.permute.xlu0 4
      %1490 = vperm.xlu0 %1489, %v1388
      %v1491 = vpop.permute.xlu0 %1490
      %1494 = vset.pattern.permute.xlu0 4
      %1495 = vperm.xlu0 %1494, %v1389
      %v1496 = vpop.permute.xlu0 %1495
      %1499 = vset.pattern.permute.xlu0 4
      %1500 = vperm.xlu0 %1499, %v1390
      %v1501 = vpop.permute.xlu0 %1500
      %1504 = vset.pattern.permute.xlu0 4
      %1505 = vperm.xlu0 %1504, %v1391
      %v1506 = vpop.permute.xlu0 %1505
      %1509 = vset.pattern.permute.xlu0 4
      %1510 = vperm.xlu0 %1509, %v1392
      %v1511 = vpop.permute.xlu0 %1510
      %1514 = vset.pattern.permute.xlu0 4
      %1515 = vperm.xlu0 %1514, %v1393
      %v1516 = vpop.permute.xlu0 %1515
      %1519 = vset.pattern.permute.xlu0 4
      %1520 = vperm.xlu0 %1519, %v1394
      %v1521 = vpop.permute.xlu0 %1520
      %1524 = vset.pattern.permute.xlu0 4
      %1525 = vperm.xlu0 %1524, %v1395
      %v1526 = vpop.permute.xlu0 %1525
      %1529 = vset.pattern.permute.xlu0 4
      %1530 = vperm.xlu0 %1529, %v1396
      %v1531 = vpop.permute.xlu0 %1530
      %1534 = vset.pattern.permute.xlu0 4
      %1535 = vperm.xlu0 %1534, %v1397
      %v1536 = vpop.permute.xlu0 %1535
      %1539 = vset.pattern.permute.xlu0 4
      %1540 = vperm.xlu0 %1539, %v1398
      %v1541 = vpop.permute.xlu0 %1540
      %1544 = vset.pattern.permute.xlu0 4
      %1545 = vperm.xlu0 %1544, %v1399
      %v1546 = vpop.permute.xlu0 %1545
      %1549 = vset.pattern.permute.xlu0 4
      %1550 = vperm.xlu0 %1549, %v1400
      %v1551 = vpop.permute.xlu0 %1550
      %1554 = vset.pattern.permute.xlu0 4
      %1555 = vperm.xlu0 %1554, %v1401
      %v1556 = vpop.permute.xlu0 %1555
      %1559 = vset.pattern.permute.xlu0 4
      %1560 = vperm.xlu0 %1559, %v1402
      %v1561 = vpop.permute.xlu0 %1560
      %v1563 = vmul.f32 %v1245, %v1406
      %v1564 = vmul.f32 %v1248, %v1411
      %v1565 = vmul.f32 %v1253, %v1416
      %v1566 = vmul.f32 %v1256, %v1421
      %v1567 = vmul.f32 %v1261, %v1426
      %v1568 = vmul.f32 %v1264, %v1431
      %v1569 = vmul.f32 %v1269, %v1436
      %v1570 = vmul.f32 %v1272, %v1441
      %v1571 = vmul.f32 %v1277, %v1446
      %v1572 = vmul.f32 %v1280, %v1451
      %v1573 = vmul.f32 %v1285, %v1456
      %v1574 = vmul.f32 %v1288, %v1461
      %v1575 = vmul.f32 %v1293, %v1466
      %v1576 = vmul.f32 %v1296, %v1471
      %v1577 = vmul.f32 %v1301, %v1476
      %v1578 = vmul.f32 %v1304, %v1481
      %v1579 = vmul.f32 %v1309, %v1486
      %v1580 = vmul.f32 %v1312, %v1491
      %v1581 = vmul.f32 %v1317, %v1496
      %v1582 = vmul.f32 %v1320, %v1501
      %v1583 = vmul.f32 %v1325, %v1506
      %v1584 = vmul.f32 %v1328, %v1511
      %v1585 = vmul.f32 %v1333, %v1516
      %v1586 = vmul.f32 %v1336, %v1521
      %v1587 = vmul.f32 %v1341, %v1526
      %v1588 = vmul.f32 %v1344, %v1531
      %v1589 = vmul.f32 %v1349, %v1536
      %v1590 = vmul.f32 %v1352, %v1541
      %v1591 = vmul.f32 %v1357, %v1546
      %v1592 = vmul.f32 %v1360, %v1551
      %v1593 = vmul.f32 %v1365, %v1556
      %v1594 = vmul.f32 %v1368, %v1561
      %v1595 = vpack.c.bf16 %v1564, %v1563
      %v1596 = vpack.c.bf16 %v1566, %v1565
      %v1597 = vpack.c.bf16 %v1568, %v1567
      %v1598 = vpack.c.bf16 %v1570, %v1569
      %v1599 = vpack.c.bf16 %v1572, %v1571
      %v1600 = vpack.c.bf16 %v1574, %v1573
      %v1601 = vpack.c.bf16 %v1576, %v1575
      %v1602 = vpack.c.bf16 %v1578, %v1577
      %v1603 = vpack.c.bf16 %v1580, %v1579
      %v1604 = vpack.c.bf16 %v1582, %v1581
      %v1605 = vpack.c.bf16 %v1584, %v1583
      %v1606 = vpack.c.bf16 %v1586, %v1585
      %v1607 = vpack.c.bf16 %v1588, %v1587
      %v1608 = vpack.c.bf16 %v1590, %v1589
      %v1609 = vpack.c.bf16 %v1592, %v1591
      %v1610 = vpack.c.bf16 %v1594, %v1593
      %v1627 = vunpack.c.l.b16 %v1595
      %v1628 = vunpack.c.h.b16 %v1595
      %v1629 = vunpack.c.l.b16 %v1596
      %v1630 = vunpack.c.h.b16 %v1596
      %v1631 = vunpack.c.l.b16 %v1597
      %v1632 = vunpack.c.h.b16 %v1597
      %v1633 = vunpack.c.l.b16 %v1598
      %v1634 = vunpack.c.h.b16 %v1598
      %v1635 = vunpack.c.l.b16 %v1599
      %v1636 = vunpack.c.h.b16 %v1599
      %v1637 = vunpack.c.l.b16 %v1600
      %v1638 = vunpack.c.h.b16 %v1600
      %v1639 = vunpack.c.l.b16 %v1601
      %v1640 = vunpack.c.h.b16 %v1601
      %v1641 = vunpack.c.l.b16 %v1602
      %v1642 = vunpack.c.h.b16 %v1602
      %v1643 = vunpack.c.l.b16 %v1603
      %v1644 = vunpack.c.h.b16 %v1603
      %v1645 = vunpack.c.l.b16 %v1604
      %v1646 = vunpack.c.h.b16 %v1604
      %v1647 = vunpack.c.l.b16 %v1605
      %v1648 = vunpack.c.h.b16 %v1605
      %v1649 = vunpack.c.l.b16 %v1606
      %v1650 = vunpack.c.h.b16 %v1606
      %v1651 = vunpack.c.l.b16 %v1607
      %v1652 = vunpack.c.h.b16 %v1607
      %v1653 = vunpack.c.l.b16 %v1608
      %v1654 = vunpack.c.h.b16 %v1608
      %v1655 = vunpack.c.l.b16 %v1609
      %v1656 = vunpack.c.h.b16 %v1609
      %v1657 = vunpack.c.l.b16 %v1610
      %v1658 = vunpack.c.h.b16 %v1610
      %v1659 = vpack.c.b16 %v1627, %v1627
      %v1660 = vpack.c.b16 %v1628, %v1628
      %v1661 = vpack.c.b16 %v1629, %v1629
      %v1662 = vpack.c.b16 %v1630, %v1630
      %v1663 = vpack.c.b16 %v1631, %v1631
      %v1664 = vpack.c.b16 %v1632, %v1632
      %v1665 = vpack.c.b16 %v1633, %v1633
      %v1666 = vpack.c.b16 %v1634, %v1634
      %v1667 = vpack.c.b16 %v1635, %v1635
      %v1668 = vpack.c.b16 %v1636, %v1636
      %v1669 = vpack.c.b16 %v1637, %v1637
      %v1670 = vpack.c.b16 %v1638, %v1638
      %v1671 = vpack.c.b16 %v1639, %v1639
      %v1672 = vpack.c.b16 %v1640, %v1640
      %v1673 = vpack.c.b16 %v1641, %v1641
      %v1674 = vpack.c.b16 %v1642, %v1642
      %v1675 = vpack.c.b16 %v1643, %v1643
      %v1676 = vpack.c.b16 %v1644, %v1644
      %v1677 = vpack.c.b16 %v1645, %v1645
      %v1678 = vpack.c.b16 %v1646, %v1646
      %v1679 = vpack.c.b16 %v1647, %v1647
      %v1680 = vpack.c.b16 %v1648, %v1648
      %v1681 = vpack.c.b16 %v1649, %v1649
      %v1682 = vpack.c.b16 %v1650, %v1650
      %v1683 = vpack.c.b16 %v1651, %v1651
      %v1684 = vpack.c.b16 %v1652, %v1652
      %v1685 = vpack.c.b16 %v1653, %v1653
      %v1686 = vpack.c.b16 %v1654, %v1654
      %v1687 = vpack.c.b16 %v1655, %v1655
      %v1688 = vpack.c.b16 %v1656, %v1656
      %v1689 = vpack.c.b16 %v1657, %v1657
      %v1690 = vpack.c.b16 %v1658, %v1658
      %vm1723 = vcmask 27648
      %1724 = vst.msk [vmem:[%s410] sm:$0xf] %vm1723, %v1659
      %1725 = vst.msk [vmem:[%s410 + $0x4] sm:$0xf] %vm1723, %v1660
      %1726 = vst.msk [vmem:[%s410 + $0x8] sm:$0xf] %vm1723, %v1661
      %1727 = vst.msk [vmem:[%s410 + $0xc] sm:$0xf] %vm1723, %v1662
      %1728 = vst.msk [vmem:[%s410 + $0x10] sm:$0xf] %vm1723, %v1663
      %1729 = vst.msk [vmem:[%s410 + $0x14] sm:$0xf] %vm1723, %v1664
      %1730 = vst.msk [vmem:[%s410 + $0x18] sm:$0xf] %vm1723, %v1665
      %1731 = vst.msk [vmem:[%s410 + $0x1c] sm:$0xf] %vm1723, %v1666
      %1732 = vst.msk [vmem:[%s410 + $0x20] sm:$0xf] %vm1723, %v1667
      %1733 = vst.msk [vmem:[%s410 + $0x24] sm:$0xf] %vm1723, %v1668
      %1734 = vst.msk [vmem:[%s410 + $0x28] sm:$0xf] %vm1723, %v1669
      %1735 = vst.msk [vmem:[%s410 + $0x2c] sm:$0xf] %vm1723, %v1670
      %1736 = vst.msk [vmem:[%s410 + $0x30] sm:$0xf] %vm1723, %v1671
      %1737 = vst.msk [vmem:[%s410 + $0x34] sm:$0xf] %vm1723, %v1672
      %1738 = vst.msk [vmem:[%s410 + $0x38] sm:$0xf] %vm1723, %v1673
      %1739 = vst.msk [vmem:[%s410 + $0x3c] sm:$0xf] %vm1723, %v1674
      %1740 = vst.msk [vmem:[%s410 + $0x40] sm:$0xf] %vm1723, %v1675
      %1741 = vst.msk [vmem:[%s410 + $0x44] sm:$0xf] %vm1723, %v1676
      %1742 = vst.msk [vmem:[%s410 + $0x48] sm:$0xf] %vm1723, %v1677
      %1743 = vst.msk [vmem:[%s410 + $0x4c] sm:$0xf] %vm1723, %v1678
      %1744 = vst.msk [vmem:[%s410 + $0x50] sm:$0xf] %vm1723, %v1679
      %1745 = vst.msk [vmem:[%s410 + $0x54] sm:$0xf] %vm1723, %v1680
      %1746 = vst.msk [vmem:[%s410 + $0x58] sm:$0xf] %vm1723, %v1681
      %1747 = vst.msk [vmem:[%s410 + $0x5c] sm:$0xf] %vm1723, %v1682
      %1748 = vst.msk [vmem:[%s410 + $0x60] sm:$0xf] %vm1723, %v1683
      %1749 = vst.msk [vmem:[%s410 + $0x64] sm:$0xf] %vm1723, %v1684
      %1750 = vst.msk [vmem:[%s410 + $0x68] sm:$0xf] %vm1723, %v1685
      %1751 = vst.msk [vmem:[%s410 + $0x6c] sm:$0xf] %vm1723, %v1686
      %1752 = vst.msk [vmem:[%s410 + $0x70] sm:$0xf] %vm1723, %v1687
      %1753 = vst.msk [vmem:[%s410 + $0x74] sm:$0xf] %vm1723, %v1688
      %1754 = vst.msk [vmem:[%s410 + $0x78] sm:$0xf] %vm1723, %v1689
      %1755 = vst.msk [vmem:[%s410 + $0x7c] sm:$0xf] %vm1723, %v1690
      %s1756 = smul.u32 32, %s25
      %p1757 = scmp.lt.s32.totalorder %s24, 1
      %s1758 = scalar_select %p1757, %s24, 1
      %p1759 = scmp.lt.s32.totalorder %s1756, 31
      %s1760 = scalar_select %p1759, %s1756, 31
      %s1761 = smul.addr %s1758, 32
      %s1762 = sadd.s32 %s1760, %s1761
      %s1763 = smul.addr %s1762, 4
      %s1764 = scalar_lea.vmem %s9, %s1763
      // Predicated region
      $region57: #{cross_attention_block.2} parent=55 // pred_check
        %p1765 = pneg %p258
      $region58: #{cross_attention_block.2} parent=55 // pred_check_branch
        %1767 = sbr.rel (%p1765) target = $region60
      $region59: #{cross_attention_block.2} parent=55 // pred_region
        %s1768 = smul.u32 32, %s25
      $region60: #{cross_attention_block.2} parent=55 // pred_fallthru
        _
    $region56: #{cross_attention_block.2} parent=5 // pred_fallthru
      _
    %p1769 = scmp.le.s32.totalorder 2, %s15
    // Predicated region
    $region61: #{cross_attention_block.2} parent=5 // pred_check
      %p1770 = pneg %p1769
    $region62: #{cross_attention_block.2} parent=5 // pred_check_branch
      %1772 = sbr.rel (%p1770) target = $region64
    $region63: #{cross_attention_block.2} parent=5 // pred_region
      %s1773 = ssub.s32 %s15, 2
      // Predicated region
      $region65: #{cross_attention_block.2} parent=63 // pred_check
        %p1774 = pneg %p264
      $region66: #{cross_attention_block.2} parent=63 // pred_check_branch
        %1776 = sbr.rel (%p1774) target = $region68
      $region67: #{cross_attention_block.2} parent=63 // pred_region
        %s1777 = smul.u32 32, %s27
        %p1778 = scmp.lt.s32.totalorder %s26, 1
        %s1779 = scalar_select %p1778, %s26, 1
        %p1780 = scmp.lt.s32.totalorder %s1777, 31
        %s1781 = scalar_select %p1780, %s1777, 31
        %s1782 = smul.addr %s1779, 32
        %s1783 = sadd.s32 %s1781, %s1782
        %s1784 = smul.addr %s1783, 4
        %s1785 = scalar_lea.vmem %s9, %s1784
      $region68: #{cross_attention_block.2} parent=63 // pred_fallthru
        _
    $region64: #{cross_attention_block.2} parent=5 // pred_fallthru
      _
  $region6: #{cross_attention_block.2} parent=0 // loop_footer
    %s19 = sadd.s32 1, %s15
  $region7: #{cross_attention_block.2} parent=0 // loop_footer_branch
    %14 = sbr.rel target = $region3
  $region8: #{cross_attention_block.2} parent=0 // loop_exit
    _

</llo_original>
